<compile_context>
chip_gen: v7x
topology: tpu7x:2x2x1
jax: 0.10.0
libtpu: 0.0.40
codegen_flags: <defaults>
</compile_context>

<pallas_src>
import functools

import jax
import jax.numpy as jnp
from jax.experimental import pallas as pl
from jax.experimental.pallas import tpu as pltpu

# ---------------- config (small, ALBERT-base-like shapes) ----------------
HIDDEN = 768          # albert-base-v2 hidden_size
MID = 128             # out1: Linear(hidden, 128)
N_CLASSES = 3
VOCAB = 100
SEQ = 8
BATCH = 2

LANE = 128            # lane width (output padded to this)
SUBLANE_BF16 = 16     # min useful LHS rows for bf16 MXU inputs
MAX_TB = 512          # batch-tile cap (VMEM-trivial at these widths)


def _round_up(x, m):
    return (x + m - 1) // m * m


def _device_tuning():
    """(is_v5, num_tensorcores) from the local device kind."""
    kind = jax.devices()[0].device_kind.lower()
    is_v5 = "v5" in kind
    n_cores = 2 if ("v7" in kind or "7x" in kind) else 1
    return is_v5, n_cores


# ------------- single-buffered resident-weight BlockSpec support ----------
def _probe_single_buffering():
    """True iff pl.Buffered(1) (single-buffered constant-index blocks) both
    lowers and runs correctly on this JAX/libtpu; otherwise fall back."""
    if not hasattr(pl, "Buffered"):
        return False

    def copy_kernel(x_ref, o_ref):
        o_ref[...] = x_ref[...]

    try:
        spec = pl.BlockSpec((8, 128), lambda i: (0, 0),
                            pipeline_mode=pl.Buffered(1))
        fn = pl.pallas_call(
            copy_kernel,
            out_shape=jax.ShapeDtypeStruct((8, 128), jnp.float32),
            grid=(2,),
            in_specs=[spec],
            out_specs=pl.BlockSpec((8, 128), lambda i: (0, 0)),
        )
        x = jnp.arange(8 * 128, dtype=jnp.float32).reshape(8, 128)
        return bool(jnp.allclose(jax.block_until_ready(fn(x)), x))
    except Exception:
        return False


_SINGLE_BUFFER_OK = _probe_single_buffering()


def _resident_spec(shape):
    """Constant-index weight/bias block: DMA'd once, VMEM-resident across the
    grid; single-buffered when supported (half the VMEM, no buffer rotation)."""
    idx = lambda i: (0,) * len(shape)
    if _SINGLE_BUFFER_OK:
        return pl.BlockSpec(shape, idx, pipeline_mode=pl.Buffered(1))
    return pl.BlockSpec(shape, idx)


# ---------------------------- Pallas kernel ------------------------------
def fused_head_kernel(feats_ref, wp_ref, bp_ref, w1_ref, b1_ref, w2_ref,
                      b2_ref, o_ref, *, bf16_epilogue):
    """Per batch tile: pooler dense+tanh -> Linear(768,128)+ReLU
       -> Linear(128,Cp) (lane-dense padded output).

    feats_ref: [TB, H]   bf16  backbone features (masked mean done in wrapper)
    wp_ref   : [H, H]    bf16 ; bp_ref: [1, H]   f32   (ALBERT pooler)
    w1_ref   : [H, MID]  bf16 ; b1_ref: [1, MID] f32   (self.out1)
    w2_ref   : [MID, Cp] bf16 ; b2_ref: [1, Cp]  f32   (self.out, 0-padded lanes)
    o_ref    : [TB, Cp]  f32
    """
    # ALBERT pooler: tanh(feats @ Wp + bp). bf16 MXU inputs, f32 accumulate.
    p = jnp.dot(feats_ref[...], wp_ref[...],
                preferred_element_type=jnp.float32) + bp_ref[...]
    if bf16_epilogue:
        pooled = jnp.tanh(p.astype(jnp.bfloat16))          # bf16 EUP (v6e/v7x)
    else:
        pooled = jnp.tanh(p).astype(jnp.bfloat16)          # f32 EUP (v5e)

    # Dropout(p=0.4) is identity at inference. out1: Linear(H, 128) + ReLU.
    h = jnp.dot(pooled, w1_ref[...],
                preferred_element_type=jnp.float32) + b1_ref[...]
    if bf16_epilogue:
        h = jnp.maximum(h.astype(jnp.bfloat16), 0.0)
    else:
        h = jnp.maximum(h, 0.0).astype(jnp.bfloat16)

    # Dropout identity again, then final Linear(128, n_classes) into 128 lanes.
    out = jnp.dot(h, w2_ref[...],
                  preferred_element_type=jnp.float32) + b2_ref[...]
    o_ref[...] = out.astype(o_ref.dtype)


# ---------------------- backbone stand-in (wrapper glue) ------------------
def _backbone_feats(input_ids, attention_mask, emb_table):
    # TODO(synk): the pretrained ALBERT encoder has no clean Pallas equivalent
    # here; an embedding-gather + attention-masked-mean stands in.
    emb = jnp.take(emb_table, input_ids, axis=0)                    # [B,S,H] f32
    m = attention_mask.astype(jnp.float32)                          # [B,S]
    w = m / jnp.maximum(jnp.sum(m, axis=1, keepdims=True), 1.0)     # 1/denom folded
    return jnp.einsum("bsh,bs->bh", emb, w).astype(jnp.bfloat16)    # [B,H] bf16


# ------------------------------- wrapper ----------------------------------
def shared_task_classifier_forward(input_ids, attention_mask, emb_table,
                                   wp, bp, w1, b1, w2, b2):
    """input_ids/attention_mask: [B, S] int32 -> logits [B, n_classes] f32."""
    B = input_ids.shape[0]
    H = wp.shape[0]
    mid = w1.shape[1]
    C = w2.shape[1]
    is_v5, n_cores = _device_tuning()

    # Backbone stand-in fused with the masked mean: the kernel only streams
    # feats[B, H] bf16 (SEQ x fewer bytes than streaming emb[B, S, H]).
    feats = _backbone_feats(input_ids, attention_mask, emb_table)   # [B,H] bf16

    # Batch tile: as large as useful (per-step overhead ~0.35 us dominates tiny
    # steps), but keep >= 1 tile per TensorCore on multi-TC chips (v7x).
    TB = min(MAX_TB, _round_up(B, SUBLANE_BF16))
    while n_cores > 1 and TB > SUBLANE_BF16 and _round_up(B, TB) // TB < n_cores:
        TB = _round_up(TB // 2, SUBLANE_BF16)
    Bp = _round_up(B, TB)
    if Bp != B:
        feats = jnp.pad(feats, ((0, Bp - B), (0, 0)))

    # Lane-dense output: pad final projection from C to 128 lanes (unmasked
    # stores); slice back to C at the end.
    Cp = _round_up(C, LANE)
    w2p = jnp.pad(w2, ((0, 0), (0, Cp - C))).astype(jnp.bfloat16)
    b2p = jnp.pad(b2, ((0, 0), (0, Cp - C)))

    # bf16 weight storage; f32 accumulation happens inside the kernel.
    wp_b = wp.astype(jnp.bfloat16)
    w1_b = w1.astype(jnp.bfloat16)
    # TODO(synk): weight quantization (int8 on v5e/v6e, fp8 on v7x MXU) would
    # halve resident weight bytes again; kept bf16 here for portability.

    grid = (Bp // TB,)

    out = pl.pallas_call(
        functools.partial(fused_head_kernel, bf16_epilogue=not is_v5),
        out_shape=jax.ShapeDtypeStruct((Bp, Cp), jnp.float32),
        grid=grid,
        in_specs=[
            pl.BlockSpec((TB, H), lambda i: (i, 0)),   # feats (streamed per tile)
            _resident_spec((H, H)),                    # pooler weight
            _resident_spec((1, H)),                    # pooler bias
            _resident_spec((H, mid)),                  # out1 weight
            _resident_spec((1, mid)),                  # out1 bias
            _resident_spec((mid, Cp)),                 # out weight (lane-padded)
            _resident_spec((1, Cp)),                   # out bias (lane-padded)
        ],
        out_specs=pl.BlockSpec((TB, Cp), lambda i: (i, 0)),
        compiler_params=pltpu.CompilerParams(
            # Batch tiles are independent -> shard across TensorCores (v7x).
            dimension_semantics=("parallel",),
        ),
    )(feats, wp_b, bp, w1_b, b1, w2p, b2p)

    return out[:B, :C]


# --------------------- pure-JAX reference (same math) ---------------------
def _reference_forward(input_ids, attention_mask, emb_table, wp, bp, w1, b1,
                       w2, b2, *, bf16_epilogue):
    bf = lambda a: a.astype(jnp.bfloat16)
    f32 = lambda a: a.astype(jnp.float32)
    feats = _backbone_feats(input_ids, attention_mask, emb_table)    # bf16 [B,H]
    p = f32(feats) @ f32(bf(wp)) + bp
    pooled = jnp.tanh(bf(p)) if bf16_epilogue else bf(jnp.tanh(p))
    h = f32(pooled) @ f32(bf(w1)) + b1
    h = jnp.maximum(bf(h), 0.0) if bf16_epilogue else bf(jnp.maximum(h, 0.0))
    return f32(h) @ f32(bf(w2)) + b2


# ---------------------------------- main ---------------------------------
if __name__ == "__main__":
    key = jax.random.PRNGKey(0)
    (k_emb, k_wp, k_bp, k_w1, k_b1, k_w2, k_b2,
     k_ids, k_ids2, k_msk2) = jax.random.split(key, 10)

    emb_table = 0.02 * jax.random.normal(k_emb, (VOCAB, HIDDEN), jnp.float32)
    wp = 0.02 * jax.random.normal(k_wp, (HIDDEN, HIDDEN), jnp.float32)
    bp = 0.02 * jax.random.normal(k_bp, (1, HIDDEN), jnp.float32)
    w1 = 0.02 * jax.random.normal(k_w1, (HIDDEN, MID), jnp.float32)
    b1 = 0.02 * jax.random.normal(k_b1, (1, MID), jnp.float32)
    w2 = 0.02 * jax.random.normal(k_w2, (MID, N_CLASSES), jnp.float32)
    b2 = 0.02 * jax.random.normal(k_b2, (1, N_CLASSES), jnp.float32)
    params = (emb_table, wp, bp, w1, b1, w2, b2)

    fwd = jax.jit(shared_task_classifier_forward)
    bf16_epi = not _device_tuning()[0]

    # Module-sized example (batch=2, seq=8).
    input_ids = jax.random.randint(k_ids, (BATCH, SEQ), 0, VOCAB, jnp.int32)
    attention_mask = jnp.ones((BATCH, SEQ), jnp.int32)
    logits = jax.block_until_ready(fwd(input_ids, attention_mask, *params))
    ref = _reference_forward(input_ids, attention_mask, *params,
                             bf16_epilogue=bf16_epi)
    assert logits.shape == (BATCH, N_CLASSES)
    assert jnp.allclose(logits, ref, atol=1e-3, rtol=1e-3), \
        float(jnp.max(jnp.abs(logits - ref)))

    # Larger batch: exercises batch tiling / multi-tile grid with VMEM-resident
    # weights and a non-trivial attention mask.
    B2 = 256
    ids2 = jax.random.randint(k_ids2, (B2, SEQ), 0, VOCAB, jnp.int32)
    mask2 = (jax.random.uniform(k_msk2, (B2, SEQ)) > 0.25).astype(jnp.int32)
    logits2 = jax.block_until_ready(fwd(ids2, mask2, *params))
    ref2 = _reference_forward(ids2, mask2, *params, bf16_epilogue=bf16_epi)
    assert logits2.shape == (B2, N_CLASSES)
    assert jnp.allclose(logits2, ref2, atol=1e-3, rtol=1e-3), \
        float(jnp.max(jnp.abs(logits2 - ref2)))

    print("KERNEL_OK")
</pallas_src>

<mosaic_0001>
module attributes {stable_mosaic.version = 11 : i64} {
  func.func @copy_kernel(%arg0: i32, %arg1: memref<8x128xf32, #tpu.memory_space<vmem>>, %arg2: memref<8x128xf32, #tpu.memory_space<vmem>>) attributes {dimension_semantics = [#tpu.dimension_semantics<arbitrary>], iteration_bounds = array<i64: 2>, scalar_prefetch = 0 : i64, scratch_operands = 0 : i64, tpu.core_type = #tpu.core_type<tc>, window_params = [{pipeline_mode = #tpu.pipeline_mode<synchronous>, transform_indices = @transform_0, window_bounds = array<i64: 8, 128>}, {pipeline_mode = #tpu.pipeline_mode<synchronous>, transform_indices = @transform_1, window_bounds = array<i64: 8, 128>}]} {
    %c0 = arith.constant 0 : index
    %c0_0 = arith.constant 0 : index
    %0 = vector.load %arg1[%c0, %c0_0] : memref<8x128xf32, #tpu.memory_space<vmem>>, vector<8x128xf32>
    %c0_1 = arith.constant 0 : index
    %c0_2 = arith.constant 0 : index
    %1 = vector.load %arg2[%c0_1, %c0_2] : memref<8x128xf32, #tpu.memory_space<vmem>>, vector<8x128xf32>
    tpu.vector_store %arg2[%c0_1, %c0_2], %0 {strides = array<i32>} : memref<8x128xf32, #tpu.memory_space<vmem>>, vector<8x128xf32>,
    return
  }
  func.func @transform_0(%arg0: i32) -> (i32, i32) {
    %c0_i32 = arith.constant 0 : i32
    %c0_i32_0 = arith.constant 0 : i32
    %c0_i32_1 = arith.constant 0 : i32
    return %c0_i32, %c0_i32_0 : i32, i32
  }
  func.func @transform_1(%arg0: i32) -> (i32, i32) {
    %c0_i32 = arith.constant 0 : i32
    %c0_i32_0 = arith.constant 0 : i32
    %c0_i32_1 = arith.constant 0 : i32
    return %c0_i32, %c0_i32_0 : i32, i32
  }
}

module attributes {stable_mosaic.version = 11 : i64} {
  func.func @fused_head_kernel(%arg0: i32, %arg1: memref<16x768xbf16, #tpu.memory_space<vmem>>, %arg2: memref<768x768xbf16, #tpu.memory_space<vmem>>, %arg3: memref<1x768xf32, #tpu.memory_space<vmem>>, %arg4: memref<768x128xbf16, #tpu.memory_space<vmem>>, %arg5: memref<1x128xf32, #tpu.memory_space<vmem>>, %arg6: memref<128x128xbf16, #tpu.memory_space<vmem>>, %arg7: memref<1x128xf32, #tpu.memory_space<vmem>>, %arg8: memref<16x128xf32, #tpu.memory_space<vmem>>) attributes {dimension_semantics = [#tpu.dimension_semantics<parallel>], iteration_bounds = array<i64: 1>, scalar_prefetch = 0 : i64, scratch_operands = 0 : i64, tpu.core_type = #tpu.core_type<tc>, window_params = [{transform_indices = @transform_0, window_bounds = array<i64: 16, 768>}, {pipeline_mode = #tpu.pipeline_mode<synchronous>, transform_indices = @transform_1, window_bounds = array<i64: 768, 768>}, {pipeline_mode = #tpu.pipeline_mode<synchronous>, transform_indices = @transform_2, window_bounds = array<i64: 1, 768>}, {pipeline_mode = #tpu.pipeline_mode<synchronous>, transform_indices = @transform_3, window_bounds = array<i64: 768, 128>}, {pipeline_mode = #tpu.pipeline_mode<synchronous>, transform_indices = @transform_4, window_bounds = array<i64: 1, 128>}, {pipeline_mode = #tpu.pipeline_mode<synchronous>, transform_indices = @transform_5, window_bounds = array<i64: 128, 128>}, {pipeline_mode = #tpu.pipeline_mode<synchronous>, transform_indices = @transform_6, window_bounds = array<i64: 1, 128>}, {transform_indices = @transform_7, window_bounds = array<i64: 16, 128>}]} {
    %c0 = arith.constant 0 : index
    %c0_0 = arith.constant 0 : index
    %0 = vector.load %arg1[%c0, %c0_0] : memref<16x768xbf16, #tpu.memory_space<vmem>>, vector<16x768xbf16>
    %c0_1 = arith.constant 0 : index
    %c0_2 = arith.constant 0 : index
    %1 = vector.load %arg2[%c0_1, %c0_2] : memref<768x768xbf16, #tpu.memory_space<vmem>>, vector<768x768xbf16>
    %cst = arith.constant dense<0.000000e+00> : vector<16x768xf32>
    %2 = tpu.matmul %0, %1, %cst {dimension_numbers = #tpu.dot_dimension_numbers<[1], [0], [0], [1], [0, 0, 1, 1], [], []>} : vector<16x768xbf16>, vector<768x768xbf16>, vector<16x768xf32> -> vector<16x768xf32>
    %c0_3 = arith.constant 0 : index
    %c0_4 = arith.constant 0 : index
    %3 = vector.load %arg3[%c0_3, %c0_4] : memref<1x768xf32, #tpu.memory_space<vmem>>, vector<1x768xf32>
    %4 = vector.broadcast %3 : vector<1x768xf32> to vector<16x768xf32>
    %5 = arith.addf %2, %4 : vector<16x768xf32>
    %6 = arith.truncf %5 : vector<16x768xf32> to vector<16x768xbf16>
    %7 = math.tanh %6 : vector<16x768xbf16>
    %c0_5 = arith.constant 0 : index
    %c0_6 = arith.constant 0 : index
    %8 = vector.load %arg4[%c0_5, %c0_6] : memref<768x128xbf16, #tpu.memory_space<vmem>>, vector<768x128xbf16>
    %cst_7 = arith.constant dense<0.000000e+00> : vector<16x128xf32>
    %9 = tpu.matmul %7, %8, %cst_7 {dimension_numbers = #tpu.dot_dimension_numbers<[1], [0], [0], [1], [0, 0, 1, 1], [], []>} : vector<16x768xbf16>, vector<768x128xbf16>, vector<16x128xf32> -> vector<16x128xf32>
    %c0_8 = arith.constant 0 : index
    %c0_9 = arith.constant 0 : index
    %10 = vector.load %arg5[%c0_8, %c0_9] : memref<1x128xf32, #tpu.memory_space<vmem>>, vector<1x128xf32>
    %11 = vector.broadcast %10 : vector<1x128xf32> to vector<16x128xf32>
    %12 = arith.addf %9, %11 : vector<16x128xf32>
    %13 = arith.truncf %12 : vector<16x128xf32> to vector<16x128xbf16>
    %cst_10 = arith.constant 0.000000e+00 : bf16
    %14 = vector.broadcast %cst_10 : bf16 to vector<16x128xbf16>
    %15 = arith.maximumf %13, %14 : vector<16x128xbf16>
    %c0_11 = arith.constant 0 : index
    %c0_12 = arith.constant 0 : index
    %16 = vector.load %arg6[%c0_11, %c0_12] : memref<128x128xbf16, #tpu.memory_space<vmem>>, vector<128x128xbf16>
    %cst_13 = arith.constant dense<0.000000e+00> : vector<16x128xf32>
    %17 = tpu.matmul %15, %16, %cst_13 {dimension_numbers = #tpu.dot_dimension_numbers<[1], [0], [0], [1], [0, 0, 1, 1], [], []>} : vector<16x128xbf16>, vector<128x128xbf16>, vector<16x128xf32> -> vector<16x128xf32>
    %c0_14 = arith.constant 0 : index
    %c0_15 = arith.constant 0 : index
    %18 = vector.load %arg7[%c0_14, %c0_15] : memref<1x128xf32, #tpu.memory_space<vmem>>, vector<1x128xf32>
    %19 = vector.broadcast %18 : vector<1x128xf32> to vector<16x128xf32>
    %20 = arith.addf %17, %19 : vector<16x128xf32>
    %c0_16 = arith.constant 0 : index
    %c0_17 = arith.constant 0 : index
    %21 = vector.load %arg8[%c0_16, %c0_17] : memref<16x128xf32, #tpu.memory_space<vmem>>, vector<16x128xf32>
    tpu.vector_store %arg8[%c0_16, %c0_17], %20 {strides = array<i32>} : memref<16x128xf32, #tpu.memory_space<vmem>>, vector<16x128xf32>,
    return
  }
  func.func @transform_0(%arg0: i32) -> (i32, i32) {
    %c0_i32 = arith.constant 0 : i32
    %c0_i32_0 = arith.constant 0 : i32
    return %arg0, %c0_i32 : i32, i32
  }
  func.func @transform_1(%arg0: i32) -> (i32, i32) {
    %c0_i32 = arith.constant 0 : i32
    %c0_i32_0 = arith.constant 0 : i32
    %c0_i32_1 = arith.constant 0 : i32
    return %c0_i32, %c0_i32_0 : i32, i32
  }
  func.func @transform_2(%arg0: i32) -> (i32, i32) {
    %c0_i32 = arith.constant 0 : i32
    %c0_i32_0 = arith.constant 0 : i32
    %c0_i32_1 = arith.constant 0 : i32
    return %c0_i32, %c0_i32_0 : i32, i32
  }
  func.func @transform_3(%arg0: i32) -> (i32, i32) {
    %c0_i32 = arith.constant 0 : i32
    %c0_i32_0 = arith.constant 0 : i32
    %c0_i32_1 = arith.constant 0 : i32
    return %c0_i32, %c0_i32_0 : i32, i32
  }
  func.func @transform_4(%arg0: i32) -> (i32, i32) {
    %c0_i32 = arith.constant 0 : i32
    %c0_i32_0 = arith.constant 0 : i32
    %c0_i32_1 = arith.constant 0 : i32
    return %c0_i32, %c0_i32_0 : i32, i32
  }
  func.func @transform_5(%arg0: i32) -> (i32, i32) {
    %c0_i32 = arith.constant 0 : i32
    %c0_i32_0 = arith.constant 0 : i32
    %c0_i32_1 = arith.constant 0 : i32
    return %c0_i32, %c0_i32_0 : i32, i32
  }
  func.func @transform_6(%arg0: i32) -> (i32, i32) {
    %c0_i32 = arith.constant 0 : i32
    %c0_i32_0 = arith.constant 0 : i32
    %c0_i32_1 = arith.constant 0 : i32
    return %c0_i32, %c0_i32_0 : i32, i32
  }
  func.func @transform_7(%arg0: i32) -> (i32, i32) {
    %c0_i32 = arith.constant 0 : i32
    %c0_i32_0 = arith.constant 0 : i32
    return %arg0, %c0_i32 : i32, i32
  }
}

</mosaic_0001>

<llo_original>
// kernel: tpu_custom_call.1
$region0: #{tpu_custom_call.1}
  #allocation0 [shape = 'u32[]', space=smem, size = 0x4, offset = 0x4, fixed_abs, tag = 'smem constant byte address 0x4 - core index']
  #allocation1 [shape = 'u32[144,128]{1,0:T(1,128)}', space=vmem, size = 0x12000, scoped, tag = 'internal scratch']
  %s0 = inlined_call_operand.hbm [shape: f32[8,128], index: 0, kind: input, shape index: {}]
  %s1 = inlined_call_operand.hbm [shape: f32[8,128], index: 1, kind: output, shape index: {}]
  %s2 = sld [smem:[#allocation0]]
  $region41: #{tpu_custom_call.1} parent=0
    _
  %s4 = ssub.s32 1, %s2
  %s5 = scalar_select 0, %s4, %s2
  $region1: #{tpu_custom_call.1} parent=0
    #allocation2 [shape = 'u8[4096]{0}', space=vmem, size = 0x1000, scoped, tag = 'input window, operand 0, single buffered']
    #allocation3 [shape = 's32[2]{0}', space=sflag, size = 0x8, scoped, tag = 'scoped memory for tpu_custom_call.1']
    #allocation4 [shape = 's32[2]{0}', space=sflag, size = 0x8, scoped, tag = 'scoped memory for tpu_custom_call.1']
    #allocation5 [shape = 'u8[4096]{0}', space=vmem, size = 0x1000, scoped, tag = 'output window, operand 0, single buffered']
    %6 = vsyncpa [#allocation3], 0
    %7 = vsyncpa [#allocation4], 0
    loop: start=0, step=1, limit=4
    $region2: #{tpu_custom_call.1} parent=1 // loop_pre_header
      _
    $region3: #{tpu_custom_call.1} parent=1 // loop_header
      %s9 = sphi 0, %s13
      %p10 = scmp.ge.s32.totalorder %s9, 4
      %s17 = sphi 0, %s17
      %s19 = sphi 0, %s17
      %s20 = sphi 0, %s19
      %s34 = sphi 0, %s20
      %s38 = sphi 0, %s38
      %s40 = sphi 0, %s38
      %s41 = sphi 0, %s40
      %s55 = sphi 0, %s41
    $region4: #{tpu_custom_call.1} parent=1 // loop_header_branch
      %12 = sbr.rel (%p10) target = $region8
    $region5: #{tpu_custom_call.1} parent=1 // loop_body
      %s14 = ssub.s32 %s9, 1
      %s15 = ssub.s32 %s9, 2
      %s16 = sadd.s32 %s9, 1
      %s18 = sadd.s32 %s17, 1
      %p21 = scmp.eq.s32.totalorder %s9, 1
      %p22 = scmp.ne.s32.totalorder %s17, %s19
      %p23 = scmp.eq.s32.totalorder %s9, 0
      %p24 = por %p22, %p23
      %p25 = scmp.ne.s32.totalorder %s17, %s19
      %p26 = scmp.eq.s32.totalorder %s14, 1
      %p27 = por %p25, %p26
      %p28 = scmp.ne.s32.totalorder %s19, %s20
      %p29 = scmp.eq.s32.totalorder %s14, 0
      %p30 = por %p28, %p29
      %p31 = scmp.ne.s32.totalorder %s19, %s20
      %p32 = scmp.eq.s32.totalorder %s15, 1
      %p33 = por %p31, %p32
      %p35 = scmp.ne.s32.totalorder %s20, %s34
      %p36 = scmp.eq.s32.totalorder %s15, 0
      %p37 = por %p35, %p36
      %s39 = sadd.s32 %s38, 1
      %p42 = scmp.eq.s32.totalorder %s9, 1
      %p43 = scmp.ne.s32.totalorder %s38, %s40
      %p44 = scmp.eq.s32.totalorder %s9, 0
      %p45 = por %p43, %p44
      %p46 = scmp.ne.s32.totalorder %s38, %s40
      %p47 = scmp.eq.s32.totalorder %s14, 1
      %p48 = por %p46, %p47
      %p49 = scmp.ne.s32.totalorder %s40, %s41
      %p50 = scmp.eq.s32.totalorder %s14, 0
      %p51 = por %p49, %p50
      %p52 = scmp.ne.s32.totalorder %s40, %s41
      %p53 = scmp.eq.s32.totalorder %s15, 1
      %p54 = por %p52, %p53
      %p56 = scmp.ne.s32.totalorder %s41, %s55
      %p57 = scmp.eq.s32.totalorder %s15, 0
      %p58 = por %p56, %p57
      %p59 = scmp.le.s32.totalorder 1, %s9
      %p60 = scmp.lt.s32.totalorder %s9, 3
      %p61 = pnand %p59, %p60
      %p62 = pneg %p61
      // Predicated region
      $region9: #{tpu_custom_call.1} parent=5 // pred_check
        _
      $region10: #{tpu_custom_call.1} parent=5 // pred_check_branch
        %64 = sbr.rel (%p61) target = $region12
      $region11: #{tpu_custom_call.1} parent=5 // pred_region
        %s65 = ssub.s32 %s9, 1
        // Predicated region
        $region13: #{tpu_custom_call.1} parent=11 // pred_check
          %p66 = pneg %p30
        $region14: #{tpu_custom_call.1} parent=11 // pred_check_branch
          %68 = sbr.rel (%p66) target = $region16
        $region15: #{tpu_custom_call.1} parent=11 // pred_region
          %s70 = ssub.s32 128, 128
          %71 = vsyncadd [#allocation3], %s70
          %s73 = sshll.u32 [#allocation2], 4
          %s74 = int_to_ptr.vmem [resolvable:$true] %s73
          %76 = dma.hbm_to_vmem [thread:$0]  %s0, 128, %s74, [#allocation3]
        $region16: #{tpu_custom_call.1} parent=11 // pred_fallthru
          _
      $region12: #{tpu_custom_call.1} parent=5 // pred_fallthru
        _
      %p77 = scmp.lt.s32.totalorder %s9, 2
      // Predicated region
      $region17: #{tpu_custom_call.1} parent=5 // pred_check
        %p78 = pneg %p77
      $region18: #{tpu_custom_call.1} parent=5 // pred_check_branch
        %80 = sbr.rel (%p78) target = $region20
      $region19: #{tpu_custom_call.1} parent=5 // pred_region
        _
      $region20: #{tpu_custom_call.1} parent=5 // pred_fallthru
        _
      %p81 = scmp.le.s32.totalorder 1, %s9
      %p82 = scmp.lt.s32.totalorder %s9, 3
      %p83 = pnand %p81, %p82
      %p84 = pneg %p83
      // Predicated region
      $region21: #{tpu_custom_call.1} parent=5 // pred_check
        _
      $region22: #{tpu_custom_call.1} parent=5 // pred_check_branch
        %86 = sbr.rel (%p83) target = $region24
      $region23: #{tpu_custom_call.1} parent=5 // pred_region
        %s87 = ssub.s32 %s9, 1
        // Predicated region
        $region25: #{tpu_custom_call.1} parent=23 // pred_check
          %p88 = pneg %p30
        $region26: #{tpu_custom_call.1} parent=23 // pred_check_branch
          %90 = sbr.rel (%p88) target = $region28
        $region27: #{tpu_custom_call.1} parent=23 // pred_region
          %91 = dma.done [#allocation3], 128
        $region28: #{tpu_custom_call.1} parent=23 // pred_fallthru
          _
        %p92 = pneg %p30
        %p93 = pneg %p27
        %p94 = pneg %p51
        %p95 = pneg %p48
        %v96 = vld [vmem:[#allocation2] sm:$0xff]
        %97 = vst [vmem:[#allocation5] sm:$0xff] %v96
        // Predicated region
        $region29: #{tpu_custom_call.1} parent=23 // pred_check
          %p98 = pneg %p48
        $region30: #{tpu_custom_call.1} parent=23 // pred_check_branch
          %100 = sbr.rel (%p98) target = $region32
        $region31: #{tpu_custom_call.1} parent=23 // pred_region
          %s102 = ssub.s32 128, 128
          %103 = vsyncadd [#allocation4], %s102
          %s105 = sshll.u32 [#allocation5], 4
          %s106 = int_to_ptr.vmem [resolvable:$true] %s105
          %108 = dma.vmem_to_hbm [thread:$0]  %s106, 128, %s1, [#allocation4]
        $region32: #{tpu_custom_call.1} parent=23 // pred_fallthru
          _
        // Predicated region
        $region33: #{tpu_custom_call.1} parent=23 // pred_check
          %p109 = pneg %p48
        $region34: #{tpu_custom_call.1} parent=23 // pred_check_branch
          %111 = sbr.rel (%p109) target = $region36
        $region35: #{tpu_custom_call.1} parent=23 // pred_region
          %112 = dma.done [#allocation4], 128
        $region36: #{tpu_custom_call.1} parent=23 // pred_fallthru
          _
      $region24: #{tpu_custom_call.1} parent=5 // pred_fallthru
        _
      %p113 = scmp.le.s32.totalorder 2, %s9
      // Predicated region
      $region37: #{tpu_custom_call.1} parent=5 // pred_check
        %p114 = pneg %p113
      $region38: #{tpu_custom_call.1} parent=5 // pred_check_branch
        %116 = sbr.rel (%p114) target = $region40
      $region39: #{tpu_custom_call.1} parent=5 // pred_region
        %s117 = ssub.s32 %s9, 2
      $region40: #{tpu_custom_call.1} parent=5 // pred_fallthru
        _
    $region6: #{tpu_custom_call.1} parent=1 // loop_footer
      %s13 = sadd.s32 1, %s9
    $region7: #{tpu_custom_call.1} parent=1 // loop_footer_branch
      %8 = sbr.rel target = $region3
    $region8: #{tpu_custom_call.1} parent=1 // loop_exit
      _
    %118 = vsyncpa [#allocation3], 1
    %s119 = scalar_lea.sflag [#allocation3], 1
    %120 = vsyncpa %s119, 1
    %121 = vsyncpa [#allocation4], 1
    %s122 = scalar_lea.sflag [#allocation4], 1
    %123 = vsyncpa %s122, 1

// kernel: shared_task_classifier_forward.1
$region0: #{shared_task_classifier_forward.1}
  #allocation0 [shape = 'u32[]', space=smem, size = 0x4, offset = 0x4, fixed_abs, tag = 'smem constant byte address 0x4 - core index']
  #allocation1 [shape = 'u32[144,128]{1,0:T(1,128)}', space=vmem, size = 0x12000, scoped, tag = 'internal scratch']
  %s0 = inlined_call_operand.vmem [shape: bf16[16,768], index: 0, kind: input, shape index: {}]
  %s1 = inlined_call_operand.vmem [shape: bf16[768,768], index: 1, kind: input, shape index: {}]
  %s2 = inlined_call_operand.vmem [shape: f32[1,768], index: 2, kind: input, shape index: {}]
  %s3 = inlined_call_operand.vmem [shape: bf16[768,128], index: 3, kind: input, shape index: {}]
  %s4 = inlined_call_operand.vmem [shape: f32[1,128], index: 4, kind: input, shape index: {}]
  %s5 = inlined_call_operand.vmem [shape: bf16[128,128], index: 5, kind: input, shape index: {}]
  %s6 = inlined_call_operand.vmem [shape: f32[1,128], index: 6, kind: input, shape index: {}]
  %s7 = inlined_call_operand.vmem [shape: f32[16,128], index: 7, kind: output, shape index: {}]
  %s8 = sld [smem:[#allocation0]]
  $region38: #{shared_task_classifier_forward.1} parent=0
    _
  %s10 = ssub.s32 1, %s8
  %s11 = scalar_select 0, %s10, %s8
  // Predicated region
  $region2: #{shared_task_classifier_forward.1} parent=0 // pred_check
    _
  $region3: #{shared_task_classifier_forward.1} parent=0 // pred_check_branch
    %13 = sbr.rel (0) target = $region5
  $region4: #{shared_task_classifier_forward.1} parent=0 // pred_region
    _
  $region5: #{shared_task_classifier_forward.1} parent=0 // pred_fallthru
    _
  // Predicated region
  $region6: #{shared_task_classifier_forward.1} parent=0 // pred_check
    _
  $region7: #{shared_task_classifier_forward.1} parent=0 // pred_check_branch
    %15 = sbr.rel (0) target = $region9
  $region8: #{shared_task_classifier_forward.1} parent=0 // pred_region
    _
  $region9: #{shared_task_classifier_forward.1} parent=0 // pred_fallthru
    _
  // Predicated region
  $region10: #{shared_task_classifier_forward.1} parent=0 // pred_check
    _
  $region11: #{shared_task_classifier_forward.1} parent=0 // pred_check_branch
    %17 = sbr.rel (0) target = $region13
  $region12: #{shared_task_classifier_forward.1} parent=0 // pred_region
    _
  $region13: #{shared_task_classifier_forward.1} parent=0 // pred_fallthru
    _
  // Predicated region
  $region14: #{shared_task_classifier_forward.1} parent=0 // pred_check
    _
  $region15: #{shared_task_classifier_forward.1} parent=0 // pred_check_branch
    %19 = sbr.rel (0) target = $region17
  $region16: #{shared_task_classifier_forward.1} parent=0 // pred_region
    _
  $region17: #{shared_task_classifier_forward.1} parent=0 // pred_fallthru
    _
  // Predicated region
  $region18: #{shared_task_classifier_forward.1} parent=0 // pred_check
    _
  $region19: #{shared_task_classifier_forward.1} parent=0 // pred_check_branch
    %21 = sbr.rel (0) target = $region21
  $region20: #{shared_task_classifier_forward.1} parent=0 // pred_region
    _
  $region21: #{shared_task_classifier_forward.1} parent=0 // pred_fallthru
    _
  // Predicated region
  $region22: #{shared_task_classifier_forward.1} parent=0 // pred_check
    _
  $region23: #{shared_task_classifier_forward.1} parent=0 // pred_check_branch
    %23 = sbr.rel (0) target = $region25
  $region24: #{shared_task_classifier_forward.1} parent=0 // pred_region
    _
  $region25: #{shared_task_classifier_forward.1} parent=0 // pred_fallthru
    _
  // Predicated region
  $region26: #{shared_task_classifier_forward.1} parent=0 // pred_check
    _
  $region27: #{shared_task_classifier_forward.1} parent=0 // pred_check_branch
    %25 = sbr.rel (0) target = $region29
  $region28: #{shared_task_classifier_forward.1} parent=0 // pred_region
    _
  $region29: #{shared_task_classifier_forward.1} parent=0 // pred_fallthru
    _
  %v27 = vld [vmem:[%s0] sm:$0xff]
  %v28 = vld [vmem:[%s0 + $0x8] sm:$0xff]
  %v29 = vld [vmem:[%s0 + $0x10] sm:$0xff]
  %v30 = vld [vmem:[%s0 + $0x18] sm:$0xff]
  %v31 = vld [vmem:[%s0 + $0x20] sm:$0xff]
  %v32 = vld [vmem:[%s0 + $0x28] sm:$0xff]
  %v33 = vld [vmem:[%s1] sm:$0xff]
  %v34 = vld [vmem:[%s1 + $0x8] sm:$0xff]
  %v35 = vld [vmem:[%s1 + $0x10] sm:$0xff]
  %v36 = vld [vmem:[%s1 + $0x18] sm:$0xff]
  %v37 = vld [vmem:[%s1 + $0x20] sm:$0xff]
  %v38 = vld [vmem:[%s1 + $0x28] sm:$0xff]
  %v39 = vld [vmem:[%s1 + $0x30] sm:$0xff]
  %v40 = vld [vmem:[%s1 + $0x38] sm:$0xff]
  %v41 = vld [vmem:[%s1 + $0x40] sm:$0xff]
  %v42 = vld [vmem:[%s1 + $0x48] sm:$0xff]
  %v43 = vld [vmem:[%s1 + $0x50] sm:$0xff]
  %v44 = vld [vmem:[%s1 + $0x58] sm:$0xff]
  %v45 = vld [vmem:[%s1 + $0x60] sm:$0xff]
  %v46 = vld [vmem:[%s1 + $0x68] sm:$0xff]
  %v47 = vld [vmem:[%s1 + $0x70] sm:$0xff]
  %v48 = vld [vmem:[%s1 + $0x78] sm:$0xff]
  %v49 = vld [vmem:[%s1 + $0x80] sm:$0xff]
  %v50 = vld [vmem:[%s1 + $0x88] sm:$0xff]
  %v51 = vld [vmem:[%s1 + $0x90] sm:$0xff]
  %v52 = vld [vmem:[%s1 + $0x98] sm:$0xff]
  %v53 = vld [vmem:[%s1 + $0xa0] sm:$0xff]
  %v54 = vld [vmem:[%s1 + $0xa8] sm:$0xff]
  %v55 = vld [vmem:[%s1 + $0xb0] sm:$0xff]
  %v56 = vld [vmem:[%s1 + $0xb8] sm:$0xff]
  %v57 = vld [vmem:[%s1 + $0xc0] sm:$0xff]
  %v58 = vld [vmem:[%s1 + $0xc8] sm:$0xff]
  %v59 = vld [vmem:[%s1 + $0xd0] sm:$0xff]
  %v60 = vld [vmem:[%s1 + $0xd8] sm:$0xff]
  %v61 = vld [vmem:[%s1 + $0xe0] sm:$0xff]
  %v62 = vld [vmem:[%s1 + $0xe8] sm:$0xff]
  %v63 = vld [vmem:[%s1 + $0xf0] sm:$0xff]
  %v64 = vld [vmem:[%s1 + $0xf8] sm:$0xff]
  %v65 = vld [vmem:[%s1 + $0x100] sm:$0xff]
  %v66 = vld [vmem:[%s1 + $0x108] sm:$0xff]
  %v67 = vld [vmem:[%s1 + $0x110] sm:$0xff]
  %v68 = vld [vmem:[%s1 + $0x118] sm:$0xff]
  %v69 = vld [vmem:[%s1 + $0x120] sm:$0xff]
  %v70 = vld [vmem:[%s1 + $0x128] sm:$0xff]
  %v71 = vld [vmem:[%s1 + $0x130] sm:$0xff]
  %v72 = vld [vmem:[%s1 + $0x138] sm:$0xff]
  %v73 = vld [vmem:[%s1 + $0x140] sm:$0xff]
  %v74 = vld [vmem:[%s1 + $0x148] sm:$0xff]
  %v75 = vld [vmem:[%s1 + $0x150] sm:$0xff]
  %v76 = vld [vmem:[%s1 + $0x158] sm:$0xff]
  %v77 = vld [vmem:[%s1 + $0x160] sm:$0xff]
  %v78 = vld [vmem:[%s1 + $0x168] sm:$0xff]
  %v79 = vld [vmem:[%s1 + $0x170] sm:$0xff]
  %v80 = vld [vmem:[%s1 + $0x178] sm:$0xff]
  %v81 = vld [vmem:[%s1 + $0x180] sm:$0xff]
  %v82 = vld [vmem:[%s1 + $0x188] sm:$0xff]
  %v83 = vld [vmem:[%s1 + $0x190] sm:$0xff]
  %v84 = vld [vmem:[%s1 + $0x198] sm:$0xff]
  %v85 = vld [vmem:[%s1 + $0x1a0] sm:$0xff]
  %v86 = vld [vmem:[%s1 + $0x1a8] sm:$0xff]
  %v87 = vld [vmem:[%s1 + $0x1b0] sm:$0xff]
  %v88 = vld [vmem:[%s1 + $0x1b8] sm:$0xff]
  %v89 = vld [vmem:[%s1 + $0x1c0] sm:$0xff]
  %v90 = vld [vmem:[%s1 + $0x1c8] sm:$0xff]
  %v91 = vld [vmem:[%s1 + $0x1d0] sm:$0xff]
  %v92 = vld [vmem:[%s1 + $0x1d8] sm:$0xff]
  %v93 = vld [vmem:[%s1 + $0x1e0] sm:$0xff]
  %v94 = vld [vmem:[%s1 + $0x1e8] sm:$0xff]
  %v95 = vld [vmem:[%s1 + $0x1f0] sm:$0xff]
  %v96 = vld [vmem:[%s1 + $0x1f8] sm:$0xff]
  %v97 = vld [vmem:[%s1 + $0x200] sm:$0xff]
  %v98 = vld [vmem:[%s1 + $0x208] sm:$0xff]
  %v99 = vld [vmem:[%s1 + $0x210] sm:$0xff]
  %v100 = vld [vmem:[%s1 + $0x218] sm:$0xff]
  %v101 = vld [vmem:[%s1 + $0x220] sm:$0xff]
  %v102 = vld [vmem:[%s1 + $0x228] sm:$0xff]
  %v103 = vld [vmem:[%s1 + $0x230] sm:$0xff]
  %v104 = vld [vmem:[%s1 + $0x238] sm:$0xff]
  %v105 = vld [vmem:[%s1 + $0x240] sm:$0xff]
  %v106 = vld [vmem:[%s1 + $0x248] sm:$0xff]
  %v107 = vld [vmem:[%s1 + $0x250] sm:$0xff]
  %v108 = vld [vmem:[%s1 + $0x258] sm:$0xff]
  %v109 = vld [vmem:[%s1 + $0x260] sm:$0xff]
  %v110 = vld [vmem:[%s1 + $0x268] sm:$0xff]
  %v111 = vld [vmem:[%s1 + $0x270] sm:$0xff]
  %v112 = vld [vmem:[%s1 + $0x278] sm:$0xff]
  %v113 = vld [vmem:[%s1 + $0x280] sm:$0xff]
  %v114 = vld [vmem:[%s1 + $0x288] sm:$0xff]
  %v115 = vld [vmem:[%s1 + $0x290] sm:$0xff]
  %v116 = vld [vmem:[%s1 + $0x298] sm:$0xff]
  %v117 = vld [vmem:[%s1 + $0x2a0] sm:$0xff]
  %v118 = vld [vmem:[%s1 + $0x2a8] sm:$0xff]
  %v119 = vld [vmem:[%s1 + $0x2b0] sm:$0xff]
  %v120 = vld [vmem:[%s1 + $0x2b8] sm:$0xff]
  %v121 = vld [vmem:[%s1 + $0x2c0] sm:$0xff]
  %v122 = vld [vmem:[%s1 + $0x2c8] sm:$0xff]
  %v123 = vld [vmem:[%s1 + $0x2d0] sm:$0xff]
  %v124 = vld [vmem:[%s1 + $0x2d8] sm:$0xff]
  %v125 = vld [vmem:[%s1 + $0x2e0] sm:$0xff]
  %v126 = vld [vmem:[%s1 + $0x2e8] sm:$0xff]
  %v127 = vld [vmem:[%s1 + $0x2f0] sm:$0xff]
  %v128 = vld [vmem:[%s1 + $0x2f8] sm:$0xff]
  %v129 = vld [vmem:[%s1 + $0x300] sm:$0xff]
  %v130 = vld [vmem:[%s1 + $0x308] sm:$0xff]
  %v131 = vld [vmem:[%s1 + $0x310] sm:$0xff]
  %v132 = vld [vmem:[%s1 + $0x318] sm:$0xff]
  %v133 = vld [vmem:[%s1 + $0x320] sm:$0xff]
  %v134 = vld [vmem:[%s1 + $0x328] sm:$0xff]
  %v135 = vld [vmem:[%s1 + $0x330] sm:$0xff]
  %v136 = vld [vmem:[%s1 + $0x338] sm:$0xff]
  %v137 = vld [vmem:[%s1 + $0x340] sm:$0xff]
  %v138 = vld [vmem:[%s1 + $0x348] sm:$0xff]
  %v139 = vld [vmem:[%s1 + $0x350] sm:$0xff]
  %v140 = vld [vmem:[%s1 + $0x358] sm:$0xff]
  %v141 = vld [vmem:[%s1 + $0x360] sm:$0xff]
  %v142 = vld [vmem:[%s1 + $0x368] sm:$0xff]
  %v143 = vld [vmem:[%s1 + $0x370] sm:$0xff]
  %v144 = vld [vmem:[%s1 + $0x378] sm:$0xff]
  %v145 = vld [vmem:[%s1 + $0x380] sm:$0xff]
  %v146 = vld [vmem:[%s1 + $0x388] sm:$0xff]
  %v147 = vld [vmem:[%s1 + $0x390] sm:$0xff]
  %v148 = vld [vmem:[%s1 + $0x398] sm:$0xff]
  %v149 = vld [vmem:[%s1 + $0x3a0] sm:$0xff]
  %v150 = vld [vmem:[%s1 + $0x3a8] sm:$0xff]
  %v151 = vld [vmem:[%s1 + $0x3b0] sm:$0xff]
  %v152 = vld [vmem:[%s1 + $0x3b8] sm:$0xff]
  %v153 = vld [vmem:[%s1 + $0x3c0] sm:$0xff]
  %v154 = vld [vmem:[%s1 + $0x3c8] sm:$0xff]
  %v155 = vld [vmem:[%s1 + $0x3d0] sm:$0xff]
  %v156 = vld [vmem:[%s1 + $0x3d8] sm:$0xff]
  %v157 = vld [vmem:[%s1 + $0x3e0] sm:$0xff]
  %v158 = vld [vmem:[%s1 + $0x3e8] sm:$0xff]
  %v159 = vld [vmem:[%s1 + $0x3f0] sm:$0xff]
  %v160 = vld [vmem:[%s1 + $0x3f8] sm:$0xff]
  %v161 = vld [vmem:[%s1 + $0x400] sm:$0xff]
  %v162 = vld [vmem:[%s1 + $0x408] sm:$0xff]
  %v163 = vld [vmem:[%s1 + $0x410] sm:$0xff]
  %v164 = vld [vmem:[%s1 + $0x418] sm:$0xff]
  %v165 = vld [vmem:[%s1 + $0x420] sm:$0xff]
  %v166 = vld [vmem:[%s1 + $0x428] sm:$0xff]
  %v167 = vld [vmem:[%s1 + $0x430] sm:$0xff]
  %v168 = vld [vmem:[%s1 + $0x438] sm:$0xff]
  %v169 = vld [vmem:[%s1 + $0x440] sm:$0xff]
  %v170 = vld [vmem:[%s1 + $0x448] sm:$0xff]
  %v171 = vld [vmem:[%s1 + $0x450] sm:$0xff]
  %v172 = vld [vmem:[%s1 + $0x458] sm:$0xff]
  %v173 = vld [vmem:[%s1 + $0x460] sm:$0xff]
  %v174 = vld [vmem:[%s1 + $0x468] sm:$0xff]
  %v175 = vld [vmem:[%s1 + $0x470] sm:$0xff]
  %v176 = vld [vmem:[%s1 + $0x478] sm:$0xff]
  %v177 = vld [vmem:[%s1 + $0x480] sm:$0xff]
  %v178 = vld [vmem:[%s1 + $0x488] sm:$0xff]
  %v179 = vld [vmem:[%s1 + $0x490] sm:$0xff]
  %v180 = vld [vmem:[%s1 + $0x498] sm:$0xff]
  %v181 = vld [vmem:[%s1 + $0x4a0] sm:$0xff]
  %v182 = vld [vmem:[%s1 + $0x4a8] sm:$0xff]
  %v183 = vld [vmem:[%s1 + $0x4b0] sm:$0xff]
  %v184 = vld [vmem:[%s1 + $0x4b8] sm:$0xff]
  %v185 = vld [vmem:[%s1 + $0x4c0] sm:$0xff]
  %v186 = vld [vmem:[%s1 + $0x4c8] sm:$0xff]
  %v187 = vld [vmem:[%s1 + $0x4d0] sm:$0xff]
  %v188 = vld [vmem:[%s1 + $0x4d8] sm:$0xff]
  %v189 = vld [vmem:[%s1 + $0x4e0] sm:$0xff]
  %v190 = vld [vmem:[%s1 + $0x4e8] sm:$0xff]
  %v191 = vld [vmem:[%s1 + $0x4f0] sm:$0xff]
  %v192 = vld [vmem:[%s1 + $0x4f8] sm:$0xff]
  %v193 = vld [vmem:[%s1 + $0x500] sm:$0xff]
  %v194 = vld [vmem:[%s1 + $0x508] sm:$0xff]
  %v195 = vld [vmem:[%s1 + $0x510] sm:$0xff]
  %v196 = vld [vmem:[%s1 + $0x518] sm:$0xff]
  %v197 = vld [vmem:[%s1 + $0x520] sm:$0xff]
  %v198 = vld [vmem:[%s1 + $0x528] sm:$0xff]
  %v199 = vld [vmem:[%s1 + $0x530] sm:$0xff]
  %v200 = vld [vmem:[%s1 + $0x538] sm:$0xff]
  %v201 = vld [vmem:[%s1 + $0x540] sm:$0xff]
  %v202 = vld [vmem:[%s1 + $0x548] sm:$0xff]
  %v203 = vld [vmem:[%s1 + $0x550] sm:$0xff]
  %v204 = vld [vmem:[%s1 + $0x558] sm:$0xff]
  %v205 = vld [vmem:[%s1 + $0x560] sm:$0xff]
  %v206 = vld [vmem:[%s1 + $0x568] sm:$0xff]
  %v207 = vld [vmem:[%s1 + $0x570] sm:$0xff]
  %v208 = vld [vmem:[%s1 + $0x578] sm:$0xff]
  %v209 = vld [vmem:[%s1 + $0x580] sm:$0xff]
  %v210 = vld [vmem:[%s1 + $0x588] sm:$0xff]
  %v211 = vld [vmem:[%s1 + $0x590] sm:$0xff]
  %v212 = vld [vmem:[%s1 + $0x598] sm:$0xff]
  %v213 = vld [vmem:[%s1 + $0x5a0] sm:$0xff]
  %v214 = vld [vmem:[%s1 + $0x5a8] sm:$0xff]
  %v215 = vld [vmem:[%s1 + $0x5b0] sm:$0xff]
  %v216 = vld [vmem:[%s1 + $0x5b8] sm:$0xff]
  %v217 = vld [vmem:[%s1 + $0x5c0] sm:$0xff]
  %v218 = vld [vmem:[%s1 + $0x5c8] sm:$0xff]
  %v219 = vld [vmem:[%s1 + $0x5d0] sm:$0xff]
  %v220 = vld [vmem:[%s1 + $0x5d8] sm:$0xff]
  %v221 = vld [vmem:[%s1 + $0x5e0] sm:$0xff]
  %v222 = vld [vmem:[%s1 + $0x5e8] sm:$0xff]
  %v223 = vld [vmem:[%s1 + $0x5f0] sm:$0xff]
  %v224 = vld [vmem:[%s1 + $0x5f8] sm:$0xff]
  %v225 = vld [vmem:[%s1 + $0x600] sm:$0xff]
  %v226 = vld [vmem:[%s1 + $0x608] sm:$0xff]
  %v227 = vld [vmem:[%s1 + $0x610] sm:$0xff]
  %v228 = vld [vmem:[%s1 + $0x618] sm:$0xff]
  %v229 = vld [vmem:[%s1 + $0x620] sm:$0xff]
  %v230 = vld [vmem:[%s1 + $0x628] sm:$0xff]
  %v231 = vld [vmem:[%s1 + $0x630] sm:$0xff]
  %v232 = vld [vmem:[%s1 + $0x638] sm:$0xff]
  %v233 = vld [vmem:[%s1 + $0x640] sm:$0xff]
  %v234 = vld [vmem:[%s1 + $0x648] sm:$0xff]
  %v235 = vld [vmem:[%s1 + $0x650] sm:$0xff]
  %v236 = vld [vmem:[%s1 + $0x658] sm:$0xff]
  %v237 = vld [vmem:[%s1 + $0x660] sm:$0xff]
  %v238 = vld [vmem:[%s1 + $0x668] sm:$0xff]
  %v239 = vld [vmem:[%s1 + $0x670] sm:$0xff]
  %v240 = vld [vmem:[%s1 + $0x678] sm:$0xff]
  %v241 = vld [vmem:[%s1 + $0x680] sm:$0xff]
  %v242 = vld [vmem:[%s1 + $0x688] sm:$0xff]
  %v243 = vld [vmem:[%s1 + $0x690] sm:$0xff]
  %v244 = vld [vmem:[%s1 + $0x698] sm:$0xff]
  %v245 = vld [vmem:[%s1 + $0x6a0] sm:$0xff]
  %v246 = vld [vmem:[%s1 + $0x6a8] sm:$0xff]
  %v247 = vld [vmem:[%s1 + $0x6b0] sm:$0xff]
  %v248 = vld [vmem:[%s1 + $0x6b8] sm:$0xff]
  %v249 = vld [vmem:[%s1 + $0x6c0] sm:$0xff]
  %v250 = vld [vmem:[%s1 + $0x6c8] sm:$0xff]
  %v251 = vld [vmem:[%s1 + $0x6d0] sm:$0xff]
  %v252 = vld [vmem:[%s1 + $0x6d8] sm:$0xff]
  %v253 = vld [vmem:[%s1 + $0x6e0] sm:$0xff]
  %v254 = vld [vmem:[%s1 + $0x6e8] sm:$0xff]
  %v255 = vld [vmem:[%s1 + $0x6f0] sm:$0xff]
  %v256 = vld [vmem:[%s1 + $0x6f8] sm:$0xff]
  %v257 = vld [vmem:[%s1 + $0x700] sm:$0xff]
  %v258 = vld [vmem:[%s1 + $0x708] sm:$0xff]
  %v259 = vld [vmem:[%s1 + $0x710] sm:$0xff]
  %v260 = vld [vmem:[%s1 + $0x718] sm:$0xff]
  %v261 = vld [vmem:[%s1 + $0x720] sm:$0xff]
  %v262 = vld [vmem:[%s1 + $0x728] sm:$0xff]
  %v263 = vld [vmem:[%s1 + $0x730] sm:$0xff]
  %v264 = vld [vmem:[%s1 + $0x738] sm:$0xff]
  %v265 = vld [vmem:[%s1 + $0x740] sm:$0xff]
  %v266 = vld [vmem:[%s1 + $0x748] sm:$0xff]
  %v267 = vld [vmem:[%s1 + $0x750] sm:$0xff]
  %v268 = vld [vmem:[%s1 + $0x758] sm:$0xff]
  %v269 = vld [vmem:[%s1 + $0x760] sm:$0xff]
  %v270 = vld [vmem:[%s1 + $0x768] sm:$0xff]
  %v271 = vld [vmem:[%s1 + $0x770] sm:$0xff]
  %v272 = vld [vmem:[%s1 + $0x778] sm:$0xff]
  %v273 = vld [vmem:[%s1 + $0x780] sm:$0xff]
  %v274 = vld [vmem:[%s1 + $0x788] sm:$0xff]
  %v275 = vld [vmem:[%s1 + $0x790] sm:$0xff]
  %v276 = vld [vmem:[%s1 + $0x798] sm:$0xff]
  %v277 = vld [vmem:[%s1 + $0x7a0] sm:$0xff]
  %v278 = vld [vmem:[%s1 + $0x7a8] sm:$0xff]
  %v279 = vld [vmem:[%s1 + $0x7b0] sm:$0xff]
  %v280 = vld [vmem:[%s1 + $0x7b8] sm:$0xff]
  %v281 = vld [vmem:[%s1 + $0x7c0] sm:$0xff]
  %v282 = vld [vmem:[%s1 + $0x7c8] sm:$0xff]
  %v283 = vld [vmem:[%s1 + $0x7d0] sm:$0xff]
  %v284 = vld [vmem:[%s1 + $0x7d8] sm:$0xff]
  %v285 = vld [vmem:[%s1 + $0x7e0] sm:$0xff]
  %v286 = vld [vmem:[%s1 + $0x7e8] sm:$0xff]
  %v287 = vld [vmem:[%s1 + $0x7f0] sm:$0xff]
  %v288 = vld [vmem:[%s1 + $0x7f8] sm:$0xff]
  %v289 = vld [vmem:[%s1 + $0x800] sm:$0xff]
  %v290 = vld [vmem:[%s1 + $0x808] sm:$0xff]
  %v291 = vld [vmem:[%s1 + $0x810] sm:$0xff]
  %v292 = vld [vmem:[%s1 + $0x818] sm:$0xff]
  %v293 = vld [vmem:[%s1 + $0x820] sm:$0xff]
  %v294 = vld [vmem:[%s1 + $0x828] sm:$0xff]
  %v295 = vld [vmem:[%s1 + $0x830] sm:$0xff]
  %v296 = vld [vmem:[%s1 + $0x838] sm:$0xff]
  %v297 = vld [vmem:[%s1 + $0x840] sm:$0xff]
  %v298 = vld [vmem:[%s1 + $0x848] sm:$0xff]
  %v299 = vld [vmem:[%s1 + $0x850] sm:$0xff]
  %v300 = vld [vmem:[%s1 + $0x858] sm:$0xff]
  %v301 = vld [vmem:[%s1 + $0x860] sm:$0xff]
  %v302 = vld [vmem:[%s1 + $0x868] sm:$0xff]
  %v303 = vld [vmem:[%s1 + $0x870] sm:$0xff]
  %v304 = vld [vmem:[%s1 + $0x878] sm:$0xff]
  %v305 = vld [vmem:[%s1 + $0x880] sm:$0xff]
  %v306 = vld [vmem:[%s1 + $0x888] sm:$0xff]
  %v307 = vld [vmem:[%s1 + $0x890] sm:$0xff]
  %v308 = vld [vmem:[%s1 + $0x898] sm:$0xff]
  %v309 = vld [vmem:[%s1 + $0x8a0] sm:$0xff]
  %v310 = vld [vmem:[%s1 + $0x8a8] sm:$0xff]
  %v311 = vld [vmem:[%s1 + $0x8b0] sm:$0xff]
  %v312 = vld [vmem:[%s1 + $0x8b8] sm:$0xff]
  %v313 = vld [vmem:[%s1 + $0x8c0] sm:$0xff]
  %v314 = vld [vmem:[%s1 + $0x8c8] sm:$0xff]
  %v315 = vld [vmem:[%s1 + $0x8d0] sm:$0xff]
  %v316 = vld [vmem:[%s1 + $0x8d8] sm:$0xff]
  %v317 = vld [vmem:[%s1 + $0x8e0] sm:$0xff]
  %v318 = vld [vmem:[%s1 + $0x8e8] sm:$0xff]
  %v319 = vld [vmem:[%s1 + $0x8f0] sm:$0xff]
  %v320 = vld [vmem:[%s1 + $0x8f8] sm:$0xff]
  %v321 = vld [vmem:[%s2] sm:$0x3f]
  %v323 = vlaneseq
  %v324 = vshrl.u32 %v323, 7
  %v325 = vsub.s32 0, %v324
  %v326 = vrot.slane %v321, %v325
  %v327 = vlaneseq
  %v328 = vshrl.u32 %v327, 7
  %v329 = vsub.s32 1, %v328
  %v330 = vrot.slane %v321, %v329
  %v331 = vlaneseq
  %v332 = vshrl.u32 %v331, 7
  %v333 = vsub.s32 2, %v332
  %v334 = vrot.slane %v321, %v333
  %v335 = vlaneseq
  %v336 = vshrl.u32 %v335, 7
  %v337 = vsub.s32 3, %v336
  %v338 = vrot.slane %v321, %v337
  %v339 = vlaneseq
  %v340 = vshrl.u32 %v339, 7
  %v341 = vsub.s32 4, %v340
  %v342 = vrot.slane %v321, %v341
  %v343 = vlaneseq
  %v344 = vshrl.u32 %v343, 7
  %v345 = vsub.s32 5, %v344
  %v346 = vrot.slane %v321, %v345
  %v359 = vunpack.c.l.b16 %v27
  %v360 = vunpack.c.h.b16 %v27
  %v361 = vunpack.c.l.b16 %v28
  %v362 = vunpack.c.h.b16 %v28
  %v363 = vunpack.c.l.b16 %v29
  %v364 = vunpack.c.h.b16 %v29
  %v365 = vunpack.c.l.b16 %v30
  %v366 = vunpack.c.h.b16 %v30
  %v367 = vunpack.c.l.b16 %v31
  %v368 = vunpack.c.h.b16 %v31
  %v369 = vunpack.c.l.b16 %v32
  %v370 = vunpack.c.h.b16 %v32
  %v371 = vpack.c.b16 %v365, %v359
  %v372 = vpack.c.b16 %v366, %v360
  %v373 = vpack.c.b16 %v367, %v361
  %v374 = vpack.c.b16 %v368, %v362
  %v375 = vpack.c.b16 %v369, %v363
  %v376 = vpack.c.b16 %v370, %v364
  %v671 = vunpack.c.l.b16 %v33
  %v672 = vunpack.c.h.b16 %v33
  %v673 = vunpack.c.l.b16 %v34
  %v674 = vunpack.c.h.b16 %v34
  %v675 = vunpack.c.l.b16 %v35
  %v676 = vunpack.c.h.b16 %v35
  %v677 = vunpack.c.l.b16 %v36
  %v678 = vunpack.c.h.b16 %v36
  %v679 = vunpack.c.l.b16 %v37
  %v680 = vunpack.c.h.b16 %v37
  %v681 = vunpack.c.l.b16 %v38
  %v682 = vunpack.c.h.b16 %v38
  %v683 = vunpack.c.l.b16 %v39
  %v684 = vunpack.c.h.b16 %v39
  %v685 = vunpack.c.l.b16 %v40
  %v686 = vunpack.c.h.b16 %v40
  %v687 = vunpack.c.l.b16 %v41
  %v688 = vunpack.c.h.b16 %v41
  %v689 = vunpack.c.l.b16 %v42
  %v690 = vunpack.c.h.b16 %v42
  %v691 = vunpack.c.l.b16 %v43
  %v692 = vunpack.c.h.b16 %v43
  %v693 = vunpack.c.l.b16 %v44
  %v694 = vunpack.c.h.b16 %v44
  %v695 = vunpack.c.l.b16 %v45
  %v696 = vunpack.c.h.b16 %v45
  %v697 = vunpack.c.l.b16 %v46
  %v698 = vunpack.c.h.b16 %v46
  %v699 = vunpack.c.l.b16 %v47
  %v700 = vunpack.c.h.b16 %v47
  %v701 = vunpack.c.l.b16 %v48
  %v702 = vunpack.c.h.b16 %v48
  %v703 = vunpack.c.l.b16 %v49
  %v704 = vunpack.c.h.b16 %v49
  %v705 = vunpack.c.l.b16 %v50
  %v706 = vunpack.c.h.b16 %v50
  %v707 = vunpack.c.l.b16 %v51
  %v708 = vunpack.c.h.b16 %v51
  %v709 = vunpack.c.l.b16 %v52
  %v710 = vunpack.c.h.b16 %v52
  %v711 = vunpack.c.l.b16 %v53
  %v712 = vunpack.c.h.b16 %v53
  %v713 = vunpack.c.l.b16 %v54
  %v714 = vunpack.c.h.b16 %v54
  %v715 = vunpack.c.l.b16 %v55
  %v716 = vunpack.c.h.b16 %v55
  %v717 = vunpack.c.l.b16 %v56
  %v718 = vunpack.c.h.b16 %v56
  %v719 = vunpack.c.l.b16 %v57
  %v720 = vunpack.c.h.b16 %v57
  %v721 = vunpack.c.l.b16 %v58
  %v722 = vunpack.c.h.b16 %v58
  %v723 = vunpack.c.l.b16 %v59
  %v724 = vunpack.c.h.b16 %v59
  %v725 = vunpack.c.l.b16 %v60
  %v726 = vunpack.c.h.b16 %v60
  %v727 = vunpack.c.l.b16 %v61
  %v728 = vunpack.c.h.b16 %v61
  %v729 = vunpack.c.l.b16 %v62
  %v730 = vunpack.c.h.b16 %v62
  %v731 = vunpack.c.l.b16 %v63
  %v732 = vunpack.c.h.b16 %v63
  %v733 = vunpack.c.l.b16 %v64
  %v734 = vunpack.c.h.b16 %v64
  %v735 = vunpack.c.l.b16 %v65
  %v736 = vunpack.c.h.b16 %v65
  %v737 = vunpack.c.l.b16 %v66
  %v738 = vunpack.c.h.b16 %v66
  %v739 = vunpack.c.l.b16 %v67
  %v740 = vunpack.c.h.b16 %v67
  %v741 = vunpack.c.l.b16 %v68
  %v742 = vunpack.c.h.b16 %v68
  %v743 = vunpack.c.l.b16 %v69
  %v744 = vunpack.c.h.b16 %v69
  %v745 = vunpack.c.l.b16 %v70
  %v746 = vunpack.c.h.b16 %v70
  %v747 = vunpack.c.l.b16 %v71
  %v748 = vunpack.c.h.b16 %v71
  %v749 = vunpack.c.l.b16 %v72
  %v750 = vunpack.c.h.b16 %v72
  %v751 = vunpack.c.l.b16 %v73
  %v752 = vunpack.c.h.b16 %v73
  %v753 = vunpack.c.l.b16 %v74
  %v754 = vunpack.c.h.b16 %v74
  %v755 = vunpack.c.l.b16 %v75
  %v756 = vunpack.c.h.b16 %v75
  %v757 = vunpack.c.l.b16 %v76
  %v758 = vunpack.c.h.b16 %v76
  %v759 = vunpack.c.l.b16 %v77
  %v760 = vunpack.c.h.b16 %v77
  %v761 = vunpack.c.l.b16 %v78
  %v762 = vunpack.c.h.b16 %v78
  %v763 = vunpack.c.l.b16 %v79
  %v764 = vunpack.c.h.b16 %v79
  %v765 = vunpack.c.l.b16 %v80
  %v766 = vunpack.c.h.b16 %v80
  %v767 = vunpack.c.l.b16 %v81
  %v768 = vunpack.c.h.b16 %v81
  %v769 = vunpack.c.l.b16 %v82
  %v770 = vunpack.c.h.b16 %v82
  %v771 = vunpack.c.l.b16 %v83
  %v772 = vunpack.c.h.b16 %v83
  %v773 = vunpack.c.l.b16 %v84
  %v774 = vunpack.c.h.b16 %v84
  %v775 = vunpack.c.l.b16 %v85
  %v776 = vunpack.c.h.b16 %v85
  %v777 = vunpack.c.l.b16 %v86
  %v778 = vunpack.c.h.b16 %v86
  %v779 = vunpack.c.l.b16 %v87
  %v780 = vunpack.c.h.b16 %v87
  %v781 = vunpack.c.l.b16 %v88
  %v782 = vunpack.c.h.b16 %v88
  %v783 = vunpack.c.l.b16 %v89
  %v784 = vunpack.c.h.b16 %v89
  %v785 = vunpack.c.l.b16 %v90
  %v786 = vunpack.c.h.b16 %v90
  %v787 = vunpack.c.l.b16 %v91
  %v788 = vunpack.c.h.b16 %v91
  %v789 = vunpack.c.l.b16 %v92
  %v790 = vunpack.c.h.b16 %v92
  %v791 = vunpack.c.l.b16 %v93
  %v792 = vunpack.c.h.b16 %v93
  %v793 = vunpack.c.l.b16 %v94
  %v794 = vunpack.c.h.b16 %v94
  %v795 = vunpack.c.l.b16 %v95
  %v796 = vunpack.c.h.b16 %v95
  %v797 = vunpack.c.l.b16 %v96
  %v798 = vunpack.c.h.b16 %v96
  %v799 = vunpack.c.l.b16 %v97
  %v800 = vunpack.c.h.b16 %v97
  %v801 = vunpack.c.l.b16 %v98
  %v802 = vunpack.c.h.b16 %v98
  %v803 = vunpack.c.l.b16 %v99
  %v804 = vunpack.c.h.b16 %v99
  %v805 = vunpack.c.l.b16 %v100
  %v806 = vunpack.c.h.b16 %v100
  %v807 = vunpack.c.l.b16 %v101
  %v808 = vunpack.c.h.b16 %v101
  %v809 = vunpack.c.l.b16 %v102
  %v810 = vunpack.c.h.b16 %v102
  %v811 = vunpack.c.l.b16 %v103
  %v812 = vunpack.c.h.b16 %v103
  %v813 = vunpack.c.l.b16 %v104
  %v814 = vunpack.c.h.b16 %v104
  %v815 = vunpack.c.l.b16 %v105
  %v816 = vunpack.c.h.b16 %v105
  %v817 = vunpack.c.l.b16 %v106
  %v818 = vunpack.c.h.b16 %v106
  %v819 = vunpack.c.l.b16 %v107
  %v820 = vunpack.c.h.b16 %v107
  %v821 = vunpack.c.l.b16 %v108
  %v822 = vunpack.c.h.b16 %v108
  %v823 = vunpack.c.l.b16 %v109
  %v824 = vunpack.c.h.b16 %v109
  %v825 = vunpack.c.l.b16 %v110
  %v826 = vunpack.c.h.b16 %v110
  %v827 = vunpack.c.l.b16 %v111
  %v828 = vunpack.c.h.b16 %v111
  %v829 = vunpack.c.l.b16 %v112
  %v830 = vunpack.c.h.b16 %v112
  %v831 = vunpack.c.l.b16 %v113
  %v832 = vunpack.c.h.b16 %v113
  %v833 = vunpack.c.l.b16 %v114
  %v834 = vunpack.c.h.b16 %v114
  %v835 = vunpack.c.l.b16 %v115
  %v836 = vunpack.c.h.b16 %v115
  %v837 = vunpack.c.l.b16 %v116
  %v838 = vunpack.c.h.b16 %v116
  %v839 = vunpack.c.l.b16 %v117
  %v840 = vunpack.c.h.b16 %v117
  %v841 = vunpack.c.l.b16 %v118
  %v842 = vunpack.c.h.b16 %v118
  %v843 = vunpack.c.l.b16 %v119
  %v844 = vunpack.c.h.b16 %v119
  %v845 = vunpack.c.l.b16 %v120
  %v846 = vunpack.c.h.b16 %v120
  %v847 = vunpack.c.l.b16 %v121
  %v848 = vunpack.c.h.b16 %v121
  %v849 = vunpack.c.l.b16 %v122
  %v850 = vunpack.c.h.b16 %v122
  %v851 = vunpack.c.l.b16 %v123
  %v852 = vunpack.c.h.b16 %v123
  %v853 = vunpack.c.l.b16 %v124
  %v854 = vunpack.c.h.b16 %v124
  %v855 = vunpack.c.l.b16 %v125
  %v856 = vunpack.c.h.b16 %v125
  %v857 = vunpack.c.l.b16 %v126
  %v858 = vunpack.c.h.b16 %v126
  %v859 = vunpack.c.l.b16 %v127
  %v860 = vunpack.c.h.b16 %v127
  %v861 = vunpack.c.l.b16 %v128
  %v862 = vunpack.c.h.b16 %v128
  %v863 = vunpack.c.l.b16 %v129
  %v864 = vunpack.c.h.b16 %v129
  %v865 = vunpack.c.l.b16 %v130
  %v866 = vunpack.c.h.b16 %v130
  %v867 = vunpack.c.l.b16 %v131
  %v868 = vunpack.c.h.b16 %v131
  %v869 = vunpack.c.l.b16 %v132
  %v870 = vunpack.c.h.b16 %v132
  %v871 = vunpack.c.l.b16 %v133
  %v872 = vunpack.c.h.b16 %v133
  %v873 = vunpack.c.l.b16 %v134
  %v874 = vunpack.c.h.b16 %v134
  %v875 = vunpack.c.l.b16 %v135
  %v876 = vunpack.c.h.b16 %v135
  %v877 = vunpack.c.l.b16 %v136
  %v878 = vunpack.c.h.b16 %v136
  %v879 = vunpack.c.l.b16 %v137
  %v880 = vunpack.c.h.b16 %v137
  %v881 = vunpack.c.l.b16 %v138
  %v882 = vunpack.c.h.b16 %v138
  %v883 = vunpack.c.l.b16 %v139
  %v884 = vunpack.c.h.b16 %v139
  %v885 = vunpack.c.l.b16 %v140
  %v886 = vunpack.c.h.b16 %v140
  %v887 = vunpack.c.l.b16 %v141
  %v888 = vunpack.c.h.b16 %v141
  %v889 = vunpack.c.l.b16 %v142
  %v890 = vunpack.c.h.b16 %v142
  %v891 = vunpack.c.l.b16 %v143
  %v892 = vunpack.c.h.b16 %v143
  %v893 = vunpack.c.l.b16 %v144
  %v894 = vunpack.c.h.b16 %v144
  %v895 = vunpack.c.l.b16 %v145
  %v896 = vunpack.c.h.b16 %v145
  %v897 = vunpack.c.l.b16 %v146
  %v898 = vunpack.c.h.b16 %v146
  %v899 = vunpack.c.l.b16 %v147
  %v900 = vunpack.c.h.b16 %v147
  %v901 = vunpack.c.l.b16 %v148
  %v902 = vunpack.c.h.b16 %v148
  %v903 = vunpack.c.l.b16 %v149
  %v904 = vunpack.c.h.b16 %v149
  %v905 = vunpack.c.l.b16 %v150
  %v906 = vunpack.c.h.b16 %v150
  %v907 = vunpack.c.l.b16 %v151
  %v908 = vunpack.c.h.b16 %v151
  %v909 = vunpack.c.l.b16 %v152
  %v910 = vunpack.c.h.b16 %v152
  %v911 = vunpack.c.l.b16 %v153
  %v912 = vunpack.c.h.b16 %v153
  %v913 = vunpack.c.l.b16 %v154
  %v914 = vunpack.c.h.b16 %v154
  %v915 = vunpack.c.l.b16 %v155
  %v916 = vunpack.c.h.b16 %v155
  %v917 = vunpack.c.l.b16 %v156
  %v918 = vunpack.c.h.b16 %v156
  %v919 = vunpack.c.l.b16 %v157
  %v920 = vunpack.c.h.b16 %v157
  %v921 = vunpack.c.l.b16 %v158
  %v922 = vunpack.c.h.b16 %v158
  %v923 = vunpack.c.l.b16 %v159
  %v924 = vunpack.c.h.b16 %v159
  %v925 = vunpack.c.l.b16 %v160
  %v926 = vunpack.c.h.b16 %v160
  %v927 = vunpack.c.l.b16 %v161
  %v928 = vunpack.c.h.b16 %v161
  %v929 = vunpack.c.l.b16 %v162
  %v930 = vunpack.c.h.b16 %v162
  %v931 = vunpack.c.l.b16 %v163
  %v932 = vunpack.c.h.b16 %v163
  %v933 = vunpack.c.l.b16 %v164
  %v934 = vunpack.c.h.b16 %v164
  %v935 = vunpack.c.l.b16 %v165
  %v936 = vunpack.c.h.b16 %v165
  %v937 = vunpack.c.l.b16 %v166
  %v938 = vunpack.c.h.b16 %v166
  %v939 = vunpack.c.l.b16 %v167
  %v940 = vunpack.c.h.b16 %v167
  %v941 = vunpack.c.l.b16 %v168
  %v942 = vunpack.c.h.b16 %v168
  %v943 = vunpack.c.l.b16 %v169
  %v944 = vunpack.c.h.b16 %v169
  %v945 = vunpack.c.l.b16 %v170
  %v946 = vunpack.c.h.b16 %v170
  %v947 = vunpack.c.l.b16 %v171
  %v948 = vunpack.c.h.b16 %v171
  %v949 = vunpack.c.l.b16 %v172
  %v950 = vunpack.c.h.b16 %v172
  %v951 = vunpack.c.l.b16 %v173
  %v952 = vunpack.c.h.b16 %v173
  %v953 = vunpack.c.l.b16 %v174
  %v954 = vunpack.c.h.b16 %v174
  %v955 = vunpack.c.l.b16 %v175
  %v956 = vunpack.c.h.b16 %v175
  %v957 = vunpack.c.l.b16 %v176
  %v958 = vunpack.c.h.b16 %v176
  %v959 = vunpack.c.l.b16 %v177
  %v960 = vunpack.c.h.b16 %v177
  %v961 = vunpack.c.l.b16 %v178
  %v962 = vunpack.c.h.b16 %v178
  %v963 = vunpack.c.l.b16 %v179
  %v964 = vunpack.c.h.b16 %v179
  %v965 = vunpack.c.l.b16 %v180
  %v966 = vunpack.c.h.b16 %v180
  %v967 = vunpack.c.l.b16 %v181
  %v968 = vunpack.c.h.b16 %v181
  %v969 = vunpack.c.l.b16 %v182
  %v970 = vunpack.c.h.b16 %v182
  %v971 = vunpack.c.l.b16 %v183
  %v972 = vunpack.c.h.b16 %v183
  %v973 = vunpack.c.l.b16 %v184
  %v974 = vunpack.c.h.b16 %v184
  %v975 = vunpack.c.l.b16 %v185
  %v976 = vunpack.c.h.b16 %v185
  %v977 = vunpack.c.l.b16 %v186
  %v978 = vunpack.c.h.b16 %v186
  %v979 = vunpack.c.l.b16 %v187
  %v980 = vunpack.c.h.b16 %v187
  %v981 = vunpack.c.l.b16 %v188
  %v982 = vunpack.c.h.b16 %v188
  %v983 = vunpack.c.l.b16 %v189
  %v984 = vunpack.c.h.b16 %v189
  %v985 = vunpack.c.l.b16 %v190
  %v986 = vunpack.c.h.b16 %v190
  %v987 = vunpack.c.l.b16 %v191
  %v988 = vunpack.c.h.b16 %v191
  %v989 = vunpack.c.l.b16 %v192
  %v990 = vunpack.c.h.b16 %v192
  %v991 = vunpack.c.l.b16 %v193
  %v992 = vunpack.c.h.b16 %v193
  %v993 = vunpack.c.l.b16 %v194
  %v994 = vunpack.c.h.b16 %v194
  %v995 = vunpack.c.l.b16 %v195
  %v996 = vunpack.c.h.b16 %v195
  %v997 = vunpack.c.l.b16 %v196
  %v998 = vunpack.c.h.b16 %v196
  %v999 = vunpack.c.l.b16 %v197
  %v1000 = vunpack.c.h.b16 %v197
  %v1001 = vunpack.c.l.b16 %v198
  %v1002 = vunpack.c.h.b16 %v198
  %v1003 = vunpack.c.l.b16 %v199
  %v1004 = vunpack.c.h.b16 %v199
  %v1005 = vunpack.c.l.b16 %v200
  %v1006 = vunpack.c.h.b16 %v200
  %v1007 = vunpack.c.l.b16 %v201
  %v1008 = vunpack.c.h.b16 %v201
  %v1009 = vunpack.c.l.b16 %v202
  %v1010 = vunpack.c.h.b16 %v202
  %v1011 = vunpack.c.l.b16 %v203
  %v1012 = vunpack.c.h.b16 %v203
  %v1013 = vunpack.c.l.b16 %v204
  %v1014 = vunpack.c.h.b16 %v204
  %v1015 = vunpack.c.l.b16 %v205
  %v1016 = vunpack.c.h.b16 %v205
  %v1017 = vunpack.c.l.b16 %v206
  %v1018 = vunpack.c.h.b16 %v206
  %v1019 = vunpack.c.l.b16 %v207
  %v1020 = vunpack.c.h.b16 %v207
  %v1021 = vunpack.c.l.b16 %v208
  %v1022 = vunpack.c.h.b16 %v208
  %v1023 = vunpack.c.l.b16 %v209
  %v1024 = vunpack.c.h.b16 %v209
  %v1025 = vunpack.c.l.b16 %v210
  %v1026 = vunpack.c.h.b16 %v210
  %v1027 = vunpack.c.l.b16 %v211
  %v1028 = vunpack.c.h.b16 %v211
  %v1029 = vunpack.c.l.b16 %v212
  %v1030 = vunpack.c.h.b16 %v212
  %v1031 = vunpack.c.l.b16 %v213
  %v1032 = vunpack.c.h.b16 %v213
  %v1033 = vunpack.c.l.b16 %v214
  %v1034 = vunpack.c.h.b16 %v214
  %v1035 = vunpack.c.l.b16 %v215
  %v1036 = vunpack.c.h.b16 %v215
  %v1037 = vunpack.c.l.b16 %v216
  %v1038 = vunpack.c.h.b16 %v216
  %v1039 = vunpack.c.l.b16 %v217
  %v1040 = vunpack.c.h.b16 %v217
  %v1041 = vunpack.c.l.b16 %v218
  %v1042 = vunpack.c.h.b16 %v218
  %v1043 = vunpack.c.l.b16 %v219
  %v1044 = vunpack.c.h.b16 %v219
  %v1045 = vunpack.c.l.b16 %v220
  %v1046 = vunpack.c.h.b16 %v220
  %v1047 = vunpack.c.l.b16 %v221
  %v1048 = vunpack.c.h.b16 %v221
  %v1049 = vunpack.c.l.b16 %v222
  %v1050 = vunpack.c.h.b16 %v222
  %v1051 = vunpack.c.l.b16 %v223
  %v1052 = vunpack.c.h.b16 %v223
  %v1053 = vunpack.c.l.b16 %v224
  %v1054 = vunpack.c.h.b16 %v224
  %v1055 = vunpack.c.l.b16 %v225
  %v1056 = vunpack.c.h.b16 %v225
  %v1057 = vunpack.c.l.b16 %v226
  %v1058 = vunpack.c.h.b16 %v226
  %v1059 = vunpack.c.l.b16 %v227
  %v1060 = vunpack.c.h.b16 %v227
  %v1061 = vunpack.c.l.b16 %v228
  %v1062 = vunpack.c.h.b16 %v228
  %v1063 = vunpack.c.l.b16 %v229
  %v1064 = vunpack.c.h.b16 %v229
  %v1065 = vunpack.c.l.b16 %v230
  %v1066 = vunpack.c.h.b16 %v230
  %v1067 = vunpack.c.l.b16 %v231
  %v1068 = vunpack.c.h.b16 %v231
  %v1069 = vunpack.c.l.b16 %v232
  %v1070 = vunpack.c.h.b16 %v232
  %v1071 = vunpack.c.l.b16 %v233
  %v1072 = vunpack.c.h.b16 %v233
  %v1073 = vunpack.c.l.b16 %v234
  %v1074 = vunpack.c.h.b16 %v234
  %v1075 = vunpack.c.l.b16 %v235
  %v1076 = vunpack.c.h.b16 %v235
  %v1077 = vunpack.c.l.b16 %v236
  %v1078 = vunpack.c.h.b16 %v236
  %v1079 = vunpack.c.l.b16 %v237
  %v1080 = vunpack.c.h.b16 %v237
  %v1081 = vunpack.c.l.b16 %v238
  %v1082 = vunpack.c.h.b16 %v238
  %v1083 = vunpack.c.l.b16 %v239
  %v1084 = vunpack.c.h.b16 %v239
  %v1085 = vunpack.c.l.b16 %v240
  %v1086 = vunpack.c.h.b16 %v240
  %v1087 = vunpack.c.l.b16 %v241
  %v1088 = vunpack.c.h.b16 %v241
  %v1089 = vunpack.c.l.b16 %v242
  %v1090 = vunpack.c.h.b16 %v242
  %v1091 = vunpack.c.l.b16 %v243
  %v1092 = vunpack.c.h.b16 %v243
  %v1093 = vunpack.c.l.b16 %v244
  %v1094 = vunpack.c.h.b16 %v244
  %v1095 = vunpack.c.l.b16 %v245
  %v1096 = vunpack.c.h.b16 %v245
  %v1097 = vunpack.c.l.b16 %v246
  %v1098 = vunpack.c.h.b16 %v246
  %v1099 = vunpack.c.l.b16 %v247
  %v1100 = vunpack.c.h.b16 %v247
  %v1101 = vunpack.c.l.b16 %v248
  %v1102 = vunpack.c.h.b16 %v248
  %v1103 = vunpack.c.l.b16 %v249
  %v1104 = vunpack.c.h.b16 %v249
  %v1105 = vunpack.c.l.b16 %v250
  %v1106 = vunpack.c.h.b16 %v250
  %v1107 = vunpack.c.l.b16 %v251
  %v1108 = vunpack.c.h.b16 %v251
  %v1109 = vunpack.c.l.b16 %v252
  %v1110 = vunpack.c.h.b16 %v252
  %v1111 = vunpack.c.l.b16 %v253
  %v1112 = vunpack.c.h.b16 %v253
  %v1113 = vunpack.c.l.b16 %v254
  %v1114 = vunpack.c.h.b16 %v254
  %v1115 = vunpack.c.l.b16 %v255
  %v1116 = vunpack.c.h.b16 %v255
  %v1117 = vunpack.c.l.b16 %v256
  %v1118 = vunpack.c.h.b16 %v256
  %v1119 = vunpack.c.l.b16 %v257
  %v1120 = vunpack.c.h.b16 %v257
  %v1121 = vunpack.c.l.b16 %v258
  %v1122 = vunpack.c.h.b16 %v258
  %v1123 = vunpack.c.l.b16 %v259
  %v1124 = vunpack.c.h.b16 %v259
  %v1125 = vunpack.c.l.b16 %v260
  %v1126 = vunpack.c.h.b16 %v260
  %v1127 = vunpack.c.l.b16 %v261
  %v1128 = vunpack.c.h.b16 %v261
  %v1129 = vunpack.c.l.b16 %v262
  %v1130 = vunpack.c.h.b16 %v262
  %v1131 = vunpack.c.l.b16 %v263
  %v1132 = vunpack.c.h.b16 %v263
  %v1133 = vunpack.c.l.b16 %v264
  %v1134 = vunpack.c.h.b16 %v264
  %v1135 = vunpack.c.l.b16 %v265
  %v1136 = vunpack.c.h.b16 %v265
  %v1137 = vunpack.c.l.b16 %v266
  %v1138 = vunpack.c.h.b16 %v266
  %v1139 = vunpack.c.l.b16 %v267
  %v1140 = vunpack.c.h.b16 %v267
  %v1141 = vunpack.c.l.b16 %v268
  %v1142 = vunpack.c.h.b16 %v268
  %v1143 = vunpack.c.l.b16 %v269
  %v1144 = vunpack.c.h.b16 %v269
  %v1145 = vunpack.c.l.b16 %v270
  %v1146 = vunpack.c.h.b16 %v270
  %v1147 = vunpack.c.l.b16 %v271
  %v1148 = vunpack.c.h.b16 %v271
  %v1149 = vunpack.c.l.b16 %v272
  %v1150 = vunpack.c.h.b16 %v272
  %v1151 = vunpack.c.l.b16 %v273
  %v1152 = vunpack.c.h.b16 %v273
  %v1153 = vunpack.c.l.b16 %v274
  %v1154 = vunpack.c.h.b16 %v274
  %v1155 = vunpack.c.l.b16 %v275
  %v1156 = vunpack.c.h.b16 %v275
  %v1157 = vunpack.c.l.b16 %v276
  %v1158 = vunpack.c.h.b16 %v276
  %v1159 = vunpack.c.l.b16 %v277
  %v1160 = vunpack.c.h.b16 %v277
  %v1161 = vunpack.c.l.b16 %v278
  %v1162 = vunpack.c.h.b16 %v278
  %v1163 = vunpack.c.l.b16 %v279
  %v1164 = vunpack.c.h.b16 %v279
  %v1165 = vunpack.c.l.b16 %v280
  %v1166 = vunpack.c.h.b16 %v280
  %v1167 = vunpack.c.l.b16 %v281
  %v1168 = vunpack.c.h.b16 %v281
  %v1169 = vunpack.c.l.b16 %v282
  %v1170 = vunpack.c.h.b16 %v282
  %v1171 = vunpack.c.l.b16 %v283
  %v1172 = vunpack.c.h.b16 %v283
  %v1173 = vunpack.c.l.b16 %v284
  %v1174 = vunpack.c.h.b16 %v284
  %v1175 = vunpack.c.l.b16 %v285
  %v1176 = vunpack.c.h.b16 %v285
  %v1177 = vunpack.c.l.b16 %v286
  %v1178 = vunpack.c.h.b16 %v286
  %v1179 = vunpack.c.l.b16 %v287
  %v1180 = vunpack.c.h.b16 %v287
  %v1181 = vunpack.c.l.b16 %v288
  %v1182 = vunpack.c.h.b16 %v288
  %v1183 = vunpack.c.l.b16 %v289
  %v1184 = vunpack.c.h.b16 %v289
  %v1185 = vunpack.c.l.b16 %v290
  %v1186 = vunpack.c.h.b16 %v290
  %v1187 = vunpack.c.l.b16 %v291
  %v1188 = vunpack.c.h.b16 %v291
  %v1189 = vunpack.c.l.b16 %v292
  %v1190 = vunpack.c.h.b16 %v292
  %v1191 = vunpack.c.l.b16 %v293
  %v1192 = vunpack.c.h.b16 %v293
  %v1193 = vunpack.c.l.b16 %v294
  %v1194 = vunpack.c.h.b16 %v294
  %v1195 = vunpack.c.l.b16 %v295
  %v1196 = vunpack.c.h.b16 %v295
  %v1197 = vunpack.c.l.b16 %v296
  %v1198 = vunpack.c.h.b16 %v296
  %v1199 = vunpack.c.l.b16 %v297
  %v1200 = vunpack.c.h.b16 %v297
  %v1201 = vunpack.c.l.b16 %v298
  %v1202 = vunpack.c.h.b16 %v298
  %v1203 = vunpack.c.l.b16 %v299
  %v1204 = vunpack.c.h.b16 %v299
  %v1205 = vunpack.c.l.b16 %v300
  %v1206 = vunpack.c.h.b16 %v300
  %v1207 = vunpack.c.l.b16 %v301
  %v1208 = vunpack.c.h.b16 %v301
  %v1209 = vunpack.c.l.b16 %v302
  %v1210 = vunpack.c.h.b16 %v302
  %v1211 = vunpack.c.l.b16 %v303
  %v1212 = vunpack.c.h.b16 %v303
  %v1213 = vunpack.c.l.b16 %v304
  %v1214 = vunpack.c.h.b16 %v304
  %v1215 = vunpack.c.l.b16 %v305
  %v1216 = vunpack.c.h.b16 %v305
  %v1217 = vunpack.c.l.b16 %v306
  %v1218 = vunpack.c.h.b16 %v306
  %v1219 = vunpack.c.l.b16 %v307
  %v1220 = vunpack.c.h.b16 %v307
  %v1221 = vunpack.c.l.b16 %v308
  %v1222 = vunpack.c.h.b16 %v308
  %v1223 = vunpack.c.l.b16 %v309
  %v1224 = vunpack.c.h.b16 %v309
  %v1225 = vunpack.c.l.b16 %v310
  %v1226 = vunpack.c.h.b16 %v310
  %v1227 = vunpack.c.l.b16 %v311
  %v1228 = vunpack.c.h.b16 %v311
  %v1229 = vunpack.c.l.b16 %v312
  %v1230 = vunpack.c.h.b16 %v312
  %v1231 = vunpack.c.l.b16 %v313
  %v1232 = vunpack.c.h.b16 %v313
  %v1233 = vunpack.c.l.b16 %v314
  %v1234 = vunpack.c.h.b16 %v314
  %v1235 = vunpack.c.l.b16 %v315
  %v1236 = vunpack.c.h.b16 %v315
  %v1237 = vunpack.c.l.b16 %v316
  %v1238 = vunpack.c.h.b16 %v316
  %v1239 = vunpack.c.l.b16 %v317
  %v1240 = vunpack.c.h.b16 %v317
  %v1241 = vunpack.c.l.b16 %v318
  %v1242 = vunpack.c.h.b16 %v318
  %v1243 = vunpack.c.l.b16 %v319
  %v1244 = vunpack.c.h.b16 %v319
  %v1245 = vunpack.c.l.b16 %v320
  %v1246 = vunpack.c.h.b16 %v320
  %v1247 = vpack.c.b16 %v677, %v671
  %v1248 = vpack.c.b16 %v678, %v672
  %v1249 = vpack.c.b16 %v679, %v673
  %v1250 = vpack.c.b16 %v680, %v674
  %v1251 = vpack.c.b16 %v681, %v675
  %v1252 = vpack.c.b16 %v682, %v676
  %v1253 = vpack.c.b16 %v689, %v683
  %v1254 = vpack.c.b16 %v690, %v684
  %v1255 = vpack.c.b16 %v691, %v685
  %v1256 = vpack.c.b16 %v692, %v686
  %v1257 = vpack.c.b16 %v693, %v687
  %v1258 = vpack.c.b16 %v694, %v688
  %v1259 = vpack.c.b16 %v701, %v695
  %v1260 = vpack.c.b16 %v702, %v696
  %v1261 = vpack.c.b16 %v703, %v697
  %v1262 = vpack.c.b16 %v704, %v698
  %v1263 = vpack.c.b16 %v705, %v699
  %v1264 = vpack.c.b16 %v706, %v700
  %v1265 = vpack.c.b16 %v713, %v707
  %v1266 = vpack.c.b16 %v714, %v708
  %v1267 = vpack.c.b16 %v715, %v709
  %v1268 = vpack.c.b16 %v716, %v710
  %v1269 = vpack.c.b16 %v717, %v711
  %v1270 = vpack.c.b16 %v718, %v712
  %v1271 = vpack.c.b16 %v725, %v719
  %v1272 = vpack.c.b16 %v726, %v720
  %v1273 = vpack.c.b16 %v727, %v721
  %v1274 = vpack.c.b16 %v728, %v722
  %v1275 = vpack.c.b16 %v729, %v723
  %v1276 = vpack.c.b16 %v730, %v724
  %v1277 = vpack.c.b16 %v737, %v731
  %v1278 = vpack.c.b16 %v738, %v732
  %v1279 = vpack.c.b16 %v739, %v733
  %v1280 = vpack.c.b16 %v740, %v734
  %v1281 = vpack.c.b16 %v741, %v735
  %v1282 = vpack.c.b16 %v742, %v736
  %v1283 = vpack.c.b16 %v749, %v743
  %v1284 = vpack.c.b16 %v750, %v744
  %v1285 = vpack.c.b16 %v751, %v745
  %v1286 = vpack.c.b16 %v752, %v746
  %v1287 = vpack.c.b16 %v753, %v747
  %v1288 = vpack.c.b16 %v754, %v748
  %v1289 = vpack.c.b16 %v761, %v755
  %v1290 = vpack.c.b16 %v762, %v756
  %v1291 = vpack.c.b16 %v763, %v757
  %v1292 = vpack.c.b16 %v764, %v758
  %v1293 = vpack.c.b16 %v765, %v759
  %v1294 = vpack.c.b16 %v766, %v760
  %v1295 = vpack.c.b16 %v773, %v767
  %v1296 = vpack.c.b16 %v774, %v768
  %v1297 = vpack.c.b16 %v775, %v769
  %v1298 = vpack.c.b16 %v776, %v770
  %v1299 = vpack.c.b16 %v777, %v771
  %v1300 = vpack.c.b16 %v778, %v772
  %v1301 = vpack.c.b16 %v785, %v779
  %v1302 = vpack.c.b16 %v786, %v780
  %v1303 = vpack.c.b16 %v787, %v781
  %v1304 = vpack.c.b16 %v788, %v782
  %v1305 = vpack.c.b16 %v789, %v783
  %v1306 = vpack.c.b16 %v790, %v784
  %v1307 = vpack.c.b16 %v797, %v791
  %v1308 = vpack.c.b16 %v798, %v792
  %v1309 = vpack.c.b16 %v799, %v793
  %v1310 = vpack.c.b16 %v800, %v794
  %v1311 = vpack.c.b16 %v801, %v795
  %v1312 = vpack.c.b16 %v802, %v796
  %v1313 = vpack.c.b16 %v809, %v803
  %v1314 = vpack.c.b16 %v810, %v804
  %v1315 = vpack.c.b16 %v811, %v805
  %v1316 = vpack.c.b16 %v812, %v806
  %v1317 = vpack.c.b16 %v813, %v807
  %v1318 = vpack.c.b16 %v814, %v808
  %v1319 = vpack.c.b16 %v821, %v815
  %v1320 = vpack.c.b16 %v822, %v816
  %v1321 = vpack.c.b16 %v823, %v817
  %v1322 = vpack.c.b16 %v824, %v818
  %v1323 = vpack.c.b16 %v825, %v819
  %v1324 = vpack.c.b16 %v826, %v820
  %v1325 = vpack.c.b16 %v833, %v827
  %v1326 = vpack.c.b16 %v834, %v828
  %v1327 = vpack.c.b16 %v835, %v829
  %v1328 = vpack.c.b16 %v836, %v830
  %v1329 = vpack.c.b16 %v837, %v831
  %v1330 = vpack.c.b16 %v838, %v832
  %v1331 = vpack.c.b16 %v845, %v839
  %v1332 = vpack.c.b16 %v846, %v840
  %v1333 = vpack.c.b16 %v847, %v841
  %v1334 = vpack.c.b16 %v848, %v842
  %v1335 = vpack.c.b16 %v849, %v843
  %v1336 = vpack.c.b16 %v850, %v844
  %v1337 = vpack.c.b16 %v857, %v851
  %v1338 = vpack.c.b16 %v858, %v852
  %v1339 = vpack.c.b16 %v859, %v853
  %v1340 = vpack.c.b16 %v860, %v854
  %v1341 = vpack.c.b16 %v861, %v855
  %v1342 = vpack.c.b16 %v862, %v856
  %v1343 = vpack.c.b16 %v869, %v863
  %v1344 = vpack.c.b16 %v870, %v864
  %v1345 = vpack.c.b16 %v871, %v865
  %v1346 = vpack.c.b16 %v872, %v866
  %v1347 = vpack.c.b16 %v873, %v867
  %v1348 = vpack.c.b16 %v874, %v868
  %v1349 = vpack.c.b16 %v881, %v875
  %v1350 = vpack.c.b16 %v882, %v876
  %v1351 = vpack.c.b16 %v883, %v877
  %v1352 = vpack.c.b16 %v884, %v878
  %v1353 = vpack.c.b16 %v885, %v879
  %v1354 = vpack.c.b16 %v886, %v880
  %v1355 = vpack.c.b16 %v893, %v887
  %v1356 = vpack.c.b16 %v894, %v888
  %v1357 = vpack.c.b16 %v895, %v889
  %v1358 = vpack.c.b16 %v896, %v890
  %v1359 = vpack.c.b16 %v897, %v891
  %v1360 = vpack.c.b16 %v898, %v892
  %v1361 = vpack.c.b16 %v905, %v899
  %v1362 = vpack.c.b16 %v906, %v900
  %v1363 = vpack.c.b16 %v907, %v901
  %v1364 = vpack.c.b16 %v908, %v902
  %v1365 = vpack.c.b16 %v909, %v903
  %v1366 = vpack.c.b16 %v910, %v904
  %v1367 = vpack.c.b16 %v917, %v911
  %v1368 = vpack.c.b16 %v918, %v912
  %v1369 = vpack.c.b16 %v919, %v913
  %v1370 = vpack.c.b16 %v920, %v914
  %v1371 = vpack.c.b16 %v921, %v915
  %v1372 = vpack.c.b16 %v922, %v916
  %v1373 = vpack.c.b16 %v929, %v923
  %v1374 = vpack.c.b16 %v930, %v924
  %v1375 = vpack.c.b16 %v931, %v925
  %v1376 = vpack.c.b16 %v932, %v926
  %v1377 = vpack.c.b16 %v933, %v927
  %v1378 = vpack.c.b16 %v934, %v928
  %v1379 = vpack.c.b16 %v941, %v935
  %v1380 = vpack.c.b16 %v942, %v936
  %v1381 = vpack.c.b16 %v943, %v937
  %v1382 = vpack.c.b16 %v944, %v938
  %v1383 = vpack.c.b16 %v945, %v939
  %v1384 = vpack.c.b16 %v946, %v940
  %v1385 = vpack.c.b16 %v953, %v947
  %v1386 = vpack.c.b16 %v954, %v948
  %v1387 = vpack.c.b16 %v955, %v949
  %v1388 = vpack.c.b16 %v956, %v950
  %v1389 = vpack.c.b16 %v957, %v951
  %v1390 = vpack.c.b16 %v958, %v952
  %v1391 = vpack.c.b16 %v965, %v959
  %v1392 = vpack.c.b16 %v966, %v960
  %v1393 = vpack.c.b16 %v967, %v961
  %v1394 = vpack.c.b16 %v968, %v962
  %v1395 = vpack.c.b16 %v969, %v963
  %v1396 = vpack.c.b16 %v970, %v964
  %v1397 = vpack.c.b16 %v977, %v971
  %v1398 = vpack.c.b16 %v978, %v972
  %v1399 = vpack.c.b16 %v979, %v973
  %v1400 = vpack.c.b16 %v980, %v974
  %v1401 = vpack.c.b16 %v981, %v975
  %v1402 = vpack.c.b16 %v982, %v976
  %v1403 = vpack.c.b16 %v989, %v983
  %v1404 = vpack.c.b16 %v990, %v984
  %v1405 = vpack.c.b16 %v991, %v985
  %v1406 = vpack.c.b16 %v992, %v986
  %v1407 = vpack.c.b16 %v993, %v987
  %v1408 = vpack.c.b16 %v994, %v988
  %v1409 = vpack.c.b16 %v1001, %v995
  %v1410 = vpack.c.b16 %v1002, %v996
  %v1411 = vpack.c.b16 %v1003, %v997
  %v1412 = vpack.c.b16 %v1004, %v998
  %v1413 = vpack.c.b16 %v1005, %v999
  %v1414 = vpack.c.b16 %v1006, %v1000
  %v1415 = vpack.c.b16 %v1013, %v1007
  %v1416 = vpack.c.b16 %v1014, %v1008
  %v1417 = vpack.c.b16 %v1015, %v1009
  %v1418 = vpack.c.b16 %v1016, %v1010
  %v1419 = vpack.c.b16 %v1017, %v1011
  %v1420 = vpack.c.b16 %v1018, %v1012
  %v1421 = vpack.c.b16 %v1025, %v1019
  %v1422 = vpack.c.b16 %v1026, %v1020
  %v1423 = vpack.c.b16 %v1027, %v1021
  %v1424 = vpack.c.b16 %v1028, %v1022
  %v1425 = vpack.c.b16 %v1029, %v1023
  %v1426 = vpack.c.b16 %v1030, %v1024
  %v1427 = vpack.c.b16 %v1037, %v1031
  %v1428 = vpack.c.b16 %v1038, %v1032
  %v1429 = vpack.c.b16 %v1039, %v1033
  %v1430 = vpack.c.b16 %v1040, %v1034
  %v1431 = vpack.c.b16 %v1041, %v1035
  %v1432 = vpack.c.b16 %v1042, %v1036
  %v1433 = vpack.c.b16 %v1049, %v1043
  %v1434 = vpack.c.b16 %v1050, %v1044
  %v1435 = vpack.c.b16 %v1051, %v1045
  %v1436 = vpack.c.b16 %v1052, %v1046
  %v1437 = vpack.c.b16 %v1053, %v1047
  %v1438 = vpack.c.b16 %v1054, %v1048
  %v1439 = vpack.c.b16 %v1061, %v1055
  %v1440 = vpack.c.b16 %v1062, %v1056
  %v1441 = vpack.c.b16 %v1063, %v1057
  %v1442 = vpack.c.b16 %v1064, %v1058
  %v1443 = vpack.c.b16 %v1065, %v1059
  %v1444 = vpack.c.b16 %v1066, %v1060
  %v1445 = vpack.c.b16 %v1073, %v1067
  %v1446 = vpack.c.b16 %v1074, %v1068
  %v1447 = vpack.c.b16 %v1075, %v1069
  %v1448 = vpack.c.b16 %v1076, %v1070
  %v1449 = vpack.c.b16 %v1077, %v1071
  %v1450 = vpack.c.b16 %v1078, %v1072
  %v1451 = vpack.c.b16 %v1085, %v1079
  %v1452 = vpack.c.b16 %v1086, %v1080
  %v1453 = vpack.c.b16 %v1087, %v1081
  %v1454 = vpack.c.b16 %v1088, %v1082
  %v1455 = vpack.c.b16 %v1089, %v1083
  %v1456 = vpack.c.b16 %v1090, %v1084
  %v1457 = vpack.c.b16 %v1097, %v1091
  %v1458 = vpack.c.b16 %v1098, %v1092
  %v1459 = vpack.c.b16 %v1099, %v1093
  %v1460 = vpack.c.b16 %v1100, %v1094
  %v1461 = vpack.c.b16 %v1101, %v1095
  %v1462 = vpack.c.b16 %v1102, %v1096
  %v1463 = vpack.c.b16 %v1109, %v1103
  %v1464 = vpack.c.b16 %v1110, %v1104
  %v1465 = vpack.c.b16 %v1111, %v1105
  %v1466 = vpack.c.b16 %v1112, %v1106
  %v1467 = vpack.c.b16 %v1113, %v1107
  %v1468 = vpack.c.b16 %v1114, %v1108
  %v1469 = vpack.c.b16 %v1121, %v1115
  %v1470 = vpack.c.b16 %v1122, %v1116
  %v1471 = vpack.c.b16 %v1123, %v1117
  %v1472 = vpack.c.b16 %v1124, %v1118
  %v1473 = vpack.c.b16 %v1125, %v1119
  %v1474 = vpack.c.b16 %v1126, %v1120
  %v1475 = vpack.c.b16 %v1133, %v1127
  %v1476 = vpack.c.b16 %v1134, %v1128
  %v1477 = vpack.c.b16 %v1135, %v1129
  %v1478 = vpack.c.b16 %v1136, %v1130
  %v1479 = vpack.c.b16 %v1137, %v1131
  %v1480 = vpack.c.b16 %v1138, %v1132
  %v1481 = vpack.c.b16 %v1145, %v1139
  %v1482 = vpack.c.b16 %v1146, %v1140
  %v1483 = vpack.c.b16 %v1147, %v1141
  %v1484 = vpack.c.b16 %v1148, %v1142
  %v1485 = vpack.c.b16 %v1149, %v1143
  %v1486 = vpack.c.b16 %v1150, %v1144
  %v1487 = vpack.c.b16 %v1157, %v1151
  %v1488 = vpack.c.b16 %v1158, %v1152
  %v1489 = vpack.c.b16 %v1159, %v1153
  %v1490 = vpack.c.b16 %v1160, %v1154
  %v1491 = vpack.c.b16 %v1161, %v1155
  %v1492 = vpack.c.b16 %v1162, %v1156
  %v1493 = vpack.c.b16 %v1169, %v1163
  %v1494 = vpack.c.b16 %v1170, %v1164
  %v1495 = vpack.c.b16 %v1171, %v1165
  %v1496 = vpack.c.b16 %v1172, %v1166
  %v1497 = vpack.c.b16 %v1173, %v1167
  %v1498 = vpack.c.b16 %v1174, %v1168
  %v1499 = vpack.c.b16 %v1181, %v1175
  %v1500 = vpack.c.b16 %v1182, %v1176
  %v1501 = vpack.c.b16 %v1183, %v1177
  %v1502 = vpack.c.b16 %v1184, %v1178
  %v1503 = vpack.c.b16 %v1185, %v1179
  %v1504 = vpack.c.b16 %v1186, %v1180
  %v1505 = vpack.c.b16 %v1193, %v1187
  %v1506 = vpack.c.b16 %v1194, %v1188
  %v1507 = vpack.c.b16 %v1195, %v1189
  %v1508 = vpack.c.b16 %v1196, %v1190
  %v1509 = vpack.c.b16 %v1197, %v1191
  %v1510 = vpack.c.b16 %v1198, %v1192
  %v1511 = vpack.c.b16 %v1205, %v1199
  %v1512 = vpack.c.b16 %v1206, %v1200
  %v1513 = vpack.c.b16 %v1207, %v1201
  %v1514 = vpack.c.b16 %v1208, %v1202
  %v1515 = vpack.c.b16 %v1209, %v1203
  %v1516 = vpack.c.b16 %v1210, %v1204
  %v1517 = vpack.c.b16 %v1217, %v1211
  %v1518 = vpack.c.b16 %v1218, %v1212
  %v1519 = vpack.c.b16 %v1219, %v1213
  %v1520 = vpack.c.b16 %v1220, %v1214
  %v1521 = vpack.c.b16 %v1221, %v1215
  %v1522 = vpack.c.b16 %v1222, %v1216
  %v1523 = vpack.c.b16 %v1229, %v1223
  %v1524 = vpack.c.b16 %v1230, %v1224
  %v1525 = vpack.c.b16 %v1231, %v1225
  %v1526 = vpack.c.b16 %v1232, %v1226
  %v1527 = vpack.c.b16 %v1233, %v1227
  %v1528 = vpack.c.b16 %v1234, %v1228
  %v1529 = vpack.c.b16 %v1241, %v1235
  %v1530 = vpack.c.b16 %v1242, %v1236
  %v1531 = vpack.c.b16 %v1243, %v1237
  %v1532 = vpack.c.b16 %v1244, %v1238
  %v1533 = vpack.c.b16 %v1245, %v1239
  %v1534 = vpack.c.b16 %v1246, %v1240
  %1823 = vmatprep.subr.bf16.mxu0 %v1248
  %1824 = vmatpush1.bf16.msra.mxu0 %v1247
  %1825 = vmatprep.subr.bf16.mxu0 %v1254
  %1826 = vmatpush1.bf16.msra.mxu0 %v1253
  %1827 = vmatprep.subr.bf16.mxu0 %v1260
  %1828 = vmatpush1.bf16.msra.mxu0 %v1259
  %1829 = vmatprep.subr.bf16.mxu0 %v1266
  %1830 = vmatpush1.bf16.msra.mxu0 %v1265
  %1831 = vmatprep.subr.bf16.mxu0 %v1272
  %1832 = vmatpush1.bf16.msra.mxu0 %v1271
  %1833 = vmatprep.subr.bf16.mxu0 %v1278
  %1834 = vmatpush1.bf16.msra.mxu0 %v1277
  %1835 = vmatprep.subr.bf16.mxu0 %v1284
  %1836 = vmatpush1.bf16.msra.mxu0 %v1283
  %1837 = vmatprep.subr.bf16.mxu0 %v1290
  %1838 = vmatpush1.bf16.msra.mxu0 %v1289
  %1839 = vmatprep.subr.bf16.mxu0 %v1296
  %1840 = vmatpush1.bf16.msra.mxu0 %v1295
  %1841 = vmatprep.subr.bf16.mxu0 %v1302
  %1842 = vmatpush1.bf16.msra.mxu0 %v1301
  %1843 = vmatprep.subr.bf16.mxu0 %v1308
  %1844 = vmatpush1.bf16.msra.mxu0 %v1307
  %1845 = vmatprep.subr.bf16.mxu0 %v1314
  %1846 = vmatpush1.bf16.msra.mxu0 %v1313
  %1847 = vmatprep.subr.bf16.mxu0 %v1320
  %1848 = vmatpush1.bf16.msra.mxu0 %v1319
  %1849 = vmatprep.subr.bf16.mxu0 %v1326
  %1850 = vmatpush1.bf16.msra.mxu0 %v1325
  %1851 = vmatprep.subr.bf16.mxu0 %v1332
  %1852 = vmatpush1.bf16.msra.mxu0 %v1331
  %1853 = vmatprep.subr.bf16.mxu0 %v1338
  %1854 = vmatpush1.bf16.msra.mxu0 %v1337
  %1855 = vmatprep.mubr.bf16.mxu0 %v372
  %1856 = vmatmul.mubr.bf16.gmra.mrb[0].mxu0 %v371
  %v1857 = vpop.f32.mrb[0].mxu0
  %v1858 = vadd.f32 %v326, %v1857
  %v1859 = vpop.f32.mrb[0].mxu0
  %v1860 = vadd.f32 %v330, %v1859
  %v1861 = vpop.f32.mrb[0].mxu0
  %v1862 = vadd.f32 %v326, %v1861
  %v1863 = vpop.f32.mrb[0].mxu0
  %v1864 = vadd.f32 %v330, %v1863
  %1865 = vdwg.mxu0
  %1866 = vmatprep.subr.bf16.mxu0 %v1344
  %1867 = vmatpush1.bf16.msra.mxu0 %v1343
  %1868 = vmatprep.subr.bf16.mxu0 %v1350
  %1869 = vmatpush1.bf16.msra.mxu0 %v1349
  %1870 = vmatprep.subr.bf16.mxu0 %v1356
  %1871 = vmatpush1.bf16.msra.mxu0 %v1355
  %1872 = vmatprep.subr.bf16.mxu0 %v1362
  %1873 = vmatpush1.bf16.msra.mxu0 %v1361
  %1874 = vmatprep.subr.bf16.mxu0 %v1368
  %1875 = vmatpush1.bf16.msra.mxu0 %v1367
  %1876 = vmatprep.subr.bf16.mxu0 %v1374
  %1877 = vmatpush1.bf16.msra.mxu0 %v1373
  %1878 = vmatprep.subr.bf16.mxu0 %v1380
  %1879 = vmatpush1.bf16.msra.mxu0 %v1379
  %1880 = vmatprep.subr.bf16.mxu0 %v1386
  %1881 = vmatpush1.bf16.msra.mxu0 %v1385
  %1882 = vmatprep.subr.bf16.mxu0 %v1392
  %1883 = vmatpush1.bf16.msra.mxu0 %v1391
  %1884 = vmatprep.subr.bf16.mxu0 %v1398
  %1885 = vmatpush1.bf16.msra.mxu0 %v1397
  %1886 = vmatprep.subr.bf16.mxu0 %v1404
  %1887 = vmatpush1.bf16.msra.mxu0 %v1403
  %1888 = vmatprep.subr.bf16.mxu0 %v1410
  %1889 = vmatpush1.bf16.msra.mxu0 %v1409
  %1890 = vmatprep.subr.bf16.mxu0 %v1416
  %1891 = vmatpush1.bf16.msra.mxu0 %v1415
  %1892 = vmatprep.subr.bf16.mxu0 %v1422
  %1893 = vmatpush1.bf16.msra.mxu0 %v1421
  %1894 = vmatprep.subr.bf16.mxu0 %v1428
  %1895 = vmatpush1.bf16.msra.mxu0 %v1427
  %1896 = vmatprep.subr.bf16.mxu0 %v1434
  %1897 = vmatpush1.bf16.msra.mxu0 %v1433
  %1898 = vmatprep.mubr.bf16.mxu0 %v374
  %1899 = vmatmul.mubr.bf16.gmra.mrb[0].mxu0 %v373
  %v1900 = vpop.f32.mrb[0].mxu0
  %v1901 = vadd.f32 %v1858, %v1900
  %v1902 = vpop.f32.mrb[0].mxu0
  %v1903 = vadd.f32 %v1860, %v1902
  %v1904 = vpop.f32.mrb[0].mxu0
  %v1905 = vadd.f32 %v1862, %v1904
  %v1906 = vpop.f32.mrb[0].mxu0
  %v1907 = vadd.f32 %v1864, %v1906
  %1908 = vdwg.mxu0
  %1909 = vmatprep.subr.bf16.mxu0 %v1440
  %1910 = vmatpush1.bf16.msra.mxu0 %v1439
  %1911 = vmatprep.subr.bf16.mxu0 %v1446
  %1912 = vmatpush1.bf16.msra.mxu0 %v1445
  %1913 = vmatprep.subr.bf16.mxu0 %v1452
  %1914 = vmatpush1.bf16.msra.mxu0 %v1451
  %1915 = vmatprep.subr.bf16.mxu0 %v1458
  %1916 = vmatpush1.bf16.msra.mxu0 %v1457
  %1917 = vmatprep.subr.bf16.mxu0 %v1464
  %1918 = vmatpush1.bf16.msra.mxu0 %v1463
  %1919 = vmatprep.subr.bf16.mxu0 %v1470
  %1920 = vmatpush1.bf16.msra.mxu0 %v1469
  %1921 = vmatprep.subr.bf16.mxu0 %v1476
  %1922 = vmatpush1.bf16.msra.mxu0 %v1475
  %1923 = vmatprep.subr.bf16.mxu0 %v1482
  %1924 = vmatpush1.bf16.msra.mxu0 %v1481
  %1925 = vmatprep.subr.bf16.mxu0 %v1488
  %1926 = vmatpush1.bf16.msra.mxu0 %v1487
  %1927 = vmatprep.subr.bf16.mxu0 %v1494
  %1928 = vmatpush1.bf16.msra.mxu0 %v1493
  %1929 = vmatprep.subr.bf16.mxu0 %v1500
  %1930 = vmatpush1.bf16.msra.mxu0 %v1499
  %1931 = vmatprep.subr.bf16.mxu0 %v1506
  %1932 = vmatpush1.bf16.msra.mxu0 %v1505
  %1933 = vmatprep.subr.bf16.mxu0 %v1512
  %1934 = vmatpush1.bf16.msra.mxu0 %v1511
  %1935 = vmatprep.subr.bf16.mxu0 %v1518
  %1936 = vmatpush1.bf16.msra.mxu0 %v1517
  %1937 = vmatprep.subr.bf16.mxu0 %v1524
  %1938 = vmatpush1.bf16.msra.mxu0 %v1523
  %1939 = vmatprep.subr.bf16.mxu0 %v1530
  %1940 = vmatpush1.bf16.msra.mxu0 %v1529
  %1941 = vmatprep.mubr.bf16.mxu0 %v376
  %1942 = vmatmul.mubr.bf16.gmra.mrb[0].mxu0 %v375
  %v1943 = vpop.f32.mrb[0].mxu0
  %v1944 = vadd.f32 %v1901, %v1943
  %v1945 = vpop.f32.mrb[0].mxu0
  %v1946 = vadd.f32 %v1903, %v1945
  %v1947 = vpop.f32.mrb[0].mxu0
  %v1948 = vadd.f32 %v1905, %v1947
  %v1949 = vpop.f32.mrb[0].mxu0
  %v1950 = vadd.f32 %v1907, %v1949
  %1951 = vdwg.mxu0
  %1952 = vmatprep.subr.bf16.mxu0 %v1250
  %1953 = vmatpush1.bf16.msra.mxu0 %v1249
  %1954 = vmatprep.subr.bf16.mxu0 %v1256
  %1955 = vmatpush1.bf16.msra.mxu0 %v1255
  %1956 = vmatprep.subr.bf16.mxu0 %v1262
  %1957 = vmatpush1.bf16.msra.mxu0 %v1261
  %1958 = vmatprep.subr.bf16.mxu0 %v1268
  %1959 = vmatpush1.bf16.msra.mxu0 %v1267
  %1960 = vmatprep.subr.bf16.mxu0 %v1274
  %1961 = vmatpush1.bf16.msra.mxu0 %v1273
  %1962 = vmatprep.subr.bf16.mxu0 %v1280
  %1963 = vmatpush1.bf16.msra.mxu0 %v1279
  %1964 = vmatprep.subr.bf16.mxu0 %v1286
  %1965 = vmatpush1.bf16.msra.mxu0 %v1285
  %1966 = vmatprep.subr.bf16.mxu0 %v1292
  %1967 = vmatpush1.bf16.msra.mxu0 %v1291
  %1968 = vmatprep.subr.bf16.mxu0 %v1298
  %1969 = vmatpush1.bf16.msra.mxu0 %v1297
  %1970 = vmatprep.subr.bf16.mxu0 %v1304
  %1971 = vmatpush1.bf16.msra.mxu0 %v1303
  %1972 = vmatprep.subr.bf16.mxu0 %v1310
  %1973 = vmatpush1.bf16.msra.mxu0 %v1309
  %1974 = vmatprep.subr.bf16.mxu0 %v1316
  %1975 = vmatpush1.bf16.msra.mxu0 %v1315
  %1976 = vmatprep.subr.bf16.mxu0 %v1322
  %1977 = vmatpush1.bf16.msra.mxu0 %v1321
  %1978 = vmatprep.subr.bf16.mxu0 %v1328
  %1979 = vmatpush1.bf16.msra.mxu0 %v1327
  %1980 = vmatprep.subr.bf16.mxu0 %v1334
  %1981 = vmatpush1.bf16.msra.mxu0 %v1333
  %1982 = vmatprep.subr.bf16.mxu0 %v1340
  %1983 = vmatpush1.bf16.msra.mxu0 %v1339
  %1984 = vmatprep.mubr.bf16.mxu0 %v372
  %1985 = vmatmul.mubr.bf16.gmra.mrb[0].mxu0 %v371
  %v1986 = vpop.f32.mrb[0].mxu0
  %v1987 = vadd.f32 %v334, %v1986
  %v1988 = vpop.f32.mrb[0].mxu0
  %v1989 = vadd.f32 %v338, %v1988
  %v1990 = vpop.f32.mrb[0].mxu0
  %v1991 = vadd.f32 %v334, %v1990
  %v1992 = vpop.f32.mrb[0].mxu0
  %v1993 = vadd.f32 %v338, %v1992
  %1994 = vdwg.mxu0
  %1995 = vmatprep.subr.bf16.mxu0 %v1346
  %1996 = vmatpush1.bf16.msra.mxu0 %v1345
  %1997 = vmatprep.subr.bf16.mxu0 %v1352
  %1998 = vmatpush1.bf16.msra.mxu0 %v1351
  %1999 = vmatprep.subr.bf16.mxu0 %v1358
  %2000 = vmatpush1.bf16.msra.mxu0 %v1357
  %2001 = vmatprep.subr.bf16.mxu0 %v1364
  %2002 = vmatpush1.bf16.msra.mxu0 %v1363
  %2003 = vmatprep.subr.bf16.mxu0 %v1370
  %2004 = vmatpush1.bf16.msra.mxu0 %v1369
  %2005 = vmatprep.subr.bf16.mxu0 %v1376
  %2006 = vmatpush1.bf16.msra.mxu0 %v1375
  %2007 = vmatprep.subr.bf16.mxu0 %v1382
  %2008 = vmatpush1.bf16.msra.mxu0 %v1381
  %2009 = vmatprep.subr.bf16.mxu0 %v1388
  %2010 = vmatpush1.bf16.msra.mxu0 %v1387
  %2011 = vmatprep.subr.bf16.mxu0 %v1394
  %2012 = vmatpush1.bf16.msra.mxu0 %v1393
  %2013 = vmatprep.subr.bf16.mxu0 %v1400
  %2014 = vmatpush1.bf16.msra.mxu0 %v1399
  %2015 = vmatprep.subr.bf16.mxu0 %v1406
  %2016 = vmatpush1.bf16.msra.mxu0 %v1405
  %2017 = vmatprep.subr.bf16.mxu0 %v1412
  %2018 = vmatpush1.bf16.msra.mxu0 %v1411
  %2019 = vmatprep.subr.bf16.mxu0 %v1418
  %2020 = vmatpush1.bf16.msra.mxu0 %v1417
  %2021 = vmatprep.subr.bf16.mxu0 %v1424
  %2022 = vmatpush1.bf16.msra.mxu0 %v1423
  %2023 = vmatprep.subr.bf16.mxu0 %v1430
  %2024 = vmatpush1.bf16.msra.mxu0 %v1429
  %2025 = vmatprep.subr.bf16.mxu0 %v1436
  %2026 = vmatpush1.bf16.msra.mxu0 %v1435
  %2027 = vmatprep.mubr.bf16.mxu0 %v374
  %2028 = vmatmul.mubr.bf16.gmra.mrb[0].mxu0 %v373
  %v2029 = vpop.f32.mrb[0].mxu0
  %v2030 = vadd.f32 %v1987, %v2029
  %v2031 = vpop.f32.mrb[0].mxu0
  %v2032 = vadd.f32 %v1989, %v2031
  %v2033 = vpop.f32.mrb[0].mxu0
  %v2034 = vadd.f32 %v1991, %v2033
  %v2035 = vpop.f32.mrb[0].mxu0
  %v2036 = vadd.f32 %v1993, %v2035
  %2037 = vdwg.mxu0
  %2038 = vmatprep.subr.bf16.mxu0 %v1442
  %2039 = vmatpush1.bf16.msra.mxu0 %v1441
  %2040 = vmatprep.subr.bf16.mxu0 %v1448
  %2041 = vmatpush1.bf16.msra.mxu0 %v1447
  %2042 = vmatprep.subr.bf16.mxu0 %v1454
  %2043 = vmatpush1.bf16.msra.mxu0 %v1453
  %2044 = vmatprep.subr.bf16.mxu0 %v1460
  %2045 = vmatpush1.bf16.msra.mxu0 %v1459
  %2046 = vmatprep.subr.bf16.mxu0 %v1466
  %2047 = vmatpush1.bf16.msra.mxu0 %v1465
  %2048 = vmatprep.subr.bf16.mxu0 %v1472
  %2049 = vmatpush1.bf16.msra.mxu0 %v1471
  %2050 = vmatprep.subr.bf16.mxu0 %v1478
  %2051 = vmatpush1.bf16.msra.mxu0 %v1477
  %2052 = vmatprep.subr.bf16.mxu0 %v1484
  %2053 = vmatpush1.bf16.msra.mxu0 %v1483
  %2054 = vmatprep.subr.bf16.mxu0 %v1490
  %2055 = vmatpush1.bf16.msra.mxu0 %v1489
  %2056 = vmatprep.subr.bf16.mxu0 %v1496
  %2057 = vmatpush1.bf16.msra.mxu0 %v1495
  %2058 = vmatprep.subr.bf16.mxu0 %v1502
  %2059 = vmatpush1.bf16.msra.mxu0 %v1501
  %2060 = vmatprep.subr.bf16.mxu0 %v1508
  %2061 = vmatpush1.bf16.msra.mxu0 %v1507
  %2062 = vmatprep.subr.bf16.mxu0 %v1514
  %2063 = vmatpush1.bf16.msra.mxu0 %v1513
  %2064 = vmatprep.subr.bf16.mxu0 %v1520
  %2065 = vmatpush1.bf16.msra.mxu0 %v1519
  %2066 = vmatprep.subr.bf16.mxu0 %v1526
  %2067 = vmatpush1.bf16.msra.mxu0 %v1525
  %2068 = vmatprep.subr.bf16.mxu0 %v1532
  %2069 = vmatpush1.bf16.msra.mxu0 %v1531
  %2070 = vmatprep.mubr.bf16.mxu0 %v376
  %2071 = vmatmul.mubr.bf16.gmra.mrb[0].mxu0 %v375
  %v2072 = vpop.f32.mrb[0].mxu0
  %v2073 = vadd.f32 %v2030, %v2072
  %v2074 = vpop.f32.mrb[0].mxu0
  %v2075 = vadd.f32 %v2032, %v2074
  %v2076 = vpop.f32.mrb[0].mxu0
  %v2077 = vadd.f32 %v2034, %v2076
  %v2078 = vpop.f32.mrb[0].mxu0
  %v2079 = vadd.f32 %v2036, %v2078
  %2080 = vdwg.mxu0
  %2081 = vmatprep.subr.bf16.mxu0 %v1252
  %2082 = vmatpush1.bf16.msra.mxu0 %v1251
  %2083 = vmatprep.subr.bf16.mxu0 %v1258
  %2084 = vmatpush1.bf16.msra.mxu0 %v1257
  %2085 = vmatprep.subr.bf16.mxu0 %v1264
  %2086 = vmatpush1.bf16.msra.mxu0 %v1263
  %2087 = vmatprep.subr.bf16.mxu0 %v1270
  %2088 = vmatpush1.bf16.msra.mxu0 %v1269
  %2089 = vmatprep.subr.bf16.mxu0 %v1276
  %2090 = vmatpush1.bf16.msra.mxu0 %v1275
  %2091 = vmatprep.subr.bf16.mxu0 %v1282
  %2092 = vmatpush1.bf16.msra.mxu0 %v1281
  %2093 = vmatprep.subr.bf16.mxu0 %v1288
  %2094 = vmatpush1.bf16.msra.mxu0 %v1287
  %2095 = vmatprep.subr.bf16.mxu0 %v1294
  %2096 = vmatpush1.bf16.msra.mxu0 %v1293
  %2097 = vmatprep.subr.bf16.mxu0 %v1300
  %2098 = vmatpush1.bf16.msra.mxu0 %v1299
  %2099 = vmatprep.subr.bf16.mxu0 %v1306
  %2100 = vmatpush1.bf16.msra.mxu0 %v1305
  %2101 = vmatprep.subr.bf16.mxu0 %v1312
  %2102 = vmatpush1.bf16.msra.mxu0 %v1311
  %2103 = vmatprep.subr.bf16.mxu0 %v1318
  %2104 = vmatpush1.bf16.msra.mxu0 %v1317
  %2105 = vmatprep.subr.bf16.mxu0 %v1324
  %2106 = vmatpush1.bf16.msra.mxu0 %v1323
  %2107 = vmatprep.subr.bf16.mxu0 %v1330
  %2108 = vmatpush1.bf16.msra.mxu0 %v1329
  %2109 = vmatprep.subr.bf16.mxu0 %v1336
  %2110 = vmatpush1.bf16.msra.mxu0 %v1335
  %2111 = vmatprep.subr.bf16.mxu0 %v1342
  %2112 = vmatpush1.bf16.msra.mxu0 %v1341
  %2113 = vmatprep.mubr.bf16.mxu0 %v372
  %2114 = vmatmul.mubr.bf16.gmra.mrb[0].mxu0 %v371
  %v2115 = vpop.f32.mrb[0].mxu0
  %v2116 = vadd.f32 %v342, %v2115
  %v2117 = vpop.f32.mrb[0].mxu0
  %v2118 = vadd.f32 %v346, %v2117
  %v2119 = vpop.f32.mrb[0].mxu0
  %v2120 = vadd.f32 %v342, %v2119
  %v2121 = vpop.f32.mrb[0].mxu0
  %v2122 = vadd.f32 %v346, %v2121
  %2123 = vdwg.mxu0
  %2124 = vmatprep.subr.bf16.mxu0 %v1348
  %2125 = vmatpush1.bf16.msra.mxu0 %v1347
  %2126 = vmatprep.subr.bf16.mxu0 %v1354
  %2127 = vmatpush1.bf16.msra.mxu0 %v1353
  %2128 = vmatprep.subr.bf16.mxu0 %v1360
  %2129 = vmatpush1.bf16.msra.mxu0 %v1359
  %2130 = vmatprep.subr.bf16.mxu0 %v1366
  %2131 = vmatpush1.bf16.msra.mxu0 %v1365
  %2132 = vmatprep.subr.bf16.mxu0 %v1372
  %2133 = vmatpush1.bf16.msra.mxu0 %v1371
  %2134 = vmatprep.subr.bf16.mxu0 %v1378
  %2135 = vmatpush1.bf16.msra.mxu0 %v1377
  %2136 = vmatprep.subr.bf16.mxu0 %v1384
  %2137 = vmatpush1.bf16.msra.mxu0 %v1383
  %2138 = vmatprep.subr.bf16.mxu0 %v1390
  %2139 = vmatpush1.bf16.msra.mxu0 %v1389
  %2140 = vmatprep.subr.bf16.mxu0 %v1396
  %2141 = vmatpush1.bf16.msra.mxu0 %v1395
  %2142 = vmatprep.subr.bf16.mxu0 %v1402
  %2143 = vmatpush1.bf16.msra.mxu0 %v1401
  %2144 = vmatprep.subr.bf16.mxu0 %v1408
  %2145 = vmatpush1.bf16.msra.mxu0 %v1407
  %2146 = vmatprep.subr.bf16.mxu0 %v1414
  %2147 = vmatpush1.bf16.msra.mxu0 %v1413
  %2148 = vmatprep.subr.bf16.mxu0 %v1420
  %2149 = vmatpush1.bf16.msra.mxu0 %v1419
  %2150 = vmatprep.subr.bf16.mxu0 %v1426
  %2151 = vmatpush1.bf16.msra.mxu0 %v1425
  %2152 = vmatprep.subr.bf16.mxu0 %v1432
  %2153 = vmatpush1.bf16.msra.mxu0 %v1431
  %2154 = vmatprep.subr.bf16.mxu0 %v1438
  %2155 = vmatpush1.bf16.msra.mxu0 %v1437
  %2156 = vmatprep.mubr.bf16.mxu0 %v374
  %2157 = vmatmul.mubr.bf16.gmra.mrb[0].mxu0 %v373
  %v2158 = vpop.f32.mrb[0].mxu0
  %v2159 = vadd.f32 %v2116, %v2158
  %v2160 = vpop.f32.mrb[0].mxu0
  %v2161 = vadd.f32 %v2118, %v2160
  %v2162 = vpop.f32.mrb[0].mxu0
  %v2163 = vadd.f32 %v2120, %v2162
  %v2164 = vpop.f32.mrb[0].mxu0
  %v2165 = vadd.f32 %v2122, %v2164
  %2166 = vdwg.mxu0
  %2167 = vmatprep.subr.bf16.mxu0 %v1444
  %2168 = vmatpush1.bf16.msra.mxu0 %v1443
  %2169 = vmatprep.subr.bf16.mxu0 %v1450
  %2170 = vmatpush1.bf16.msra.mxu0 %v1449
  %2171 = vmatprep.subr.bf16.mxu0 %v1456
  %2172 = vmatpush1.bf16.msra.mxu0 %v1455
  %2173 = vmatprep.subr.bf16.mxu0 %v1462
  %2174 = vmatpush1.bf16.msra.mxu0 %v1461
  %2175 = vmatprep.subr.bf16.mxu0 %v1468
  %2176 = vmatpush1.bf16.msra.mxu0 %v1467
  %2177 = vmatprep.subr.bf16.mxu0 %v1474
  %2178 = vmatpush1.bf16.msra.mxu0 %v1473
  %2179 = vmatprep.subr.bf16.mxu0 %v1480
  %2180 = vmatpush1.bf16.msra.mxu0 %v1479
  %2181 = vmatprep.subr.bf16.mxu0 %v1486
  %2182 = vmatpush1.bf16.msra.mxu0 %v1485
  %2183 = vmatprep.subr.bf16.mxu0 %v1492
  %2184 = vmatpush1.bf16.msra.mxu0 %v1491
  %2185 = vmatprep.subr.bf16.mxu0 %v1498
  %2186 = vmatpush1.bf16.msra.mxu0 %v1497
  %2187 = vmatprep.subr.bf16.mxu0 %v1504
  %2188 = vmatpush1.bf16.msra.mxu0 %v1503
  %2189 = vmatprep.subr.bf16.mxu0 %v1510
  %2190 = vmatpush1.bf16.msra.mxu0 %v1509
  %2191 = vmatprep.subr.bf16.mxu0 %v1516
  %2192 = vmatpush1.bf16.msra.mxu0 %v1515
  %2193 = vmatprep.subr.bf16.mxu0 %v1522
  %2194 = vmatpush1.bf16.msra.mxu0 %v1521
  %2195 = vmatprep.subr.bf16.mxu0 %v1528
  %2196 = vmatpush1.bf16.msra.mxu0 %v1527
  %2197 = vmatprep.subr.bf16.mxu0 %v1534
  %2198 = vmatpush1.bf16.msra.mxu0 %v1533
  %2199 = vmatprep.mubr.bf16.mxu0 %v376
  %2200 = vmatmul.mubr.bf16.gmra.mrb[0].mxu0 %v375
  %v2201 = vpop.f32.mrb[0].mxu0
  %v2202 = vadd.f32 %v2159, %v2201
  %v2203 = vpop.f32.mrb[0].mxu0
  %v2204 = vadd.f32 %v2161, %v2203
  %v2205 = vpop.f32.mrb[0].mxu0
  %v2206 = vadd.f32 %v2163, %v2205
  %v2207 = vpop.f32.mrb[0].mxu0
  %v2208 = vadd.f32 %v2165, %v2207
  %2209 = vdwg.mxu0
  %v2210 = vpack.c.bf16 %v1948, %v1944
  %v2211 = vpack.c.bf16 %v1950, %v1946
  %v2212 = vpack.c.bf16 %v2077, %v2073
  %v2213 = vpack.c.bf16 %v2079, %v2075
  %v2214 = vpack.c.bf16 %v2206, %v2202
  %v2215 = vpack.c.bf16 %v2208, %v2204
  %v2216 = vtanh.bf16.pop %v2210
  %v2217 = vtanh.bf16.pop %v2211
  %v2218 = vtanh.bf16.pop %v2212
  %v2219 = vtanh.bf16.pop %v2213
  %v2220 = vtanh.bf16.pop %v2214
  %v2221 = vtanh.bf16.pop %v2215
  %v2222 = vld [vmem:[%s3] sm:$0xf]
  %v2223 = vld [vmem:[%s3 + $0x4] sm:$0xf]
  %v2224 = vld [vmem:[%s3 + $0x8] sm:$0xf]
  %v2225 = vld [vmem:[%s3 + $0xc] sm:$0xf]
  %v2226 = vld [vmem:[%s3 + $0x10] sm:$0xf]
  %v2227 = vld [vmem:[%s3 + $0x14] sm:$0xf]
  %v2228 = vld [vmem:[%s3 + $0x18] sm:$0xf]
  %v2229 = vld [vmem:[%s3 + $0x1c] sm:$0xf]
  %v2230 = vld [vmem:[%s3 + $0x20] sm:$0xf]
  %v2231 = vld [vmem:[%s3 + $0x24] sm:$0xf]
  %v2232 = vld [vmem:[%s3 + $0x28] sm:$0xf]
  %v2233 = vld [vmem:[%s3 + $0x2c] sm:$0xf]
  %v2234 = vld [vmem:[%s3 + $0x30] sm:$0xf]
  %v2235 = vld [vmem:[%s3 + $0x34] sm:$0xf]
  %v2236 = vld [vmem:[%s3 + $0x38] sm:$0xf]
  %v2237 = vld [vmem:[%s3 + $0x3c] sm:$0xf]
  %v2238 = vld [vmem:[%s3 + $0x40] sm:$0xf]
  %v2239 = vld [vmem:[%s3 + $0x44] sm:$0xf]
  %v2240 = vld [vmem:[%s3 + $0x48] sm:$0xf]
  %v2241 = vld [vmem:[%s3 + $0x4c] sm:$0xf]
  %v2242 = vld [vmem:[%s3 + $0x50] sm:$0xf]
  %v2243 = vld [vmem:[%s3 + $0x54] sm:$0xf]
  %v2244 = vld [vmem:[%s3 + $0x58] sm:$0xf]
  %v2245 = vld [vmem:[%s3 + $0x5c] sm:$0xf]
  %v2246 = vld [vmem:[%s3 + $0x60] sm:$0xf]
  %v2247 = vld [vmem:[%s3 + $0x64] sm:$0xf]
  %v2248 = vld [vmem:[%s3 + $0x68] sm:$0xf]
  %v2249 = vld [vmem:[%s3 + $0x6c] sm:$0xf]
  %v2250 = vld [vmem:[%s3 + $0x70] sm:$0xf]
  %v2251 = vld [vmem:[%s3 + $0x74] sm:$0xf]
  %v2252 = vld [vmem:[%s3 + $0x78] sm:$0xf]
  %v2253 = vld [vmem:[%s3 + $0x7c] sm:$0xf]
  %v2254 = vld [vmem:[%s3 + $0x80] sm:$0xf]
  %v2255 = vld [vmem:[%s3 + $0x84] sm:$0xf]
  %v2256 = vld [vmem:[%s3 + $0x88] sm:$0xf]
  %v2257 = vld [vmem:[%s3 + $0x8c] sm:$0xf]
  %v2258 = vld [vmem:[%s3 + $0x90] sm:$0xf]
  %v2259 = vld [vmem:[%s3 + $0x94] sm:$0xf]
  %v2260 = vld [vmem:[%s3 + $0x98] sm:$0xf]
  %v2261 = vld [vmem:[%s3 + $0x9c] sm:$0xf]
  %v2262 = vld [vmem:[%s3 + $0xa0] sm:$0xf]
  %v2263 = vld [vmem:[%s3 + $0xa4] sm:$0xf]
  %v2264 = vld [vmem:[%s3 + $0xa8] sm:$0xf]
  %v2265 = vld [vmem:[%s3 + $0xac] sm:$0xf]
  %v2266 = vld [vmem:[%s3 + $0xb0] sm:$0xf]
  %v2267 = vld [vmem:[%s3 + $0xb4] sm:$0xf]
  %v2268 = vld [vmem:[%s3 + $0xb8] sm:$0xf]
  %v2269 = vld [vmem:[%s3 + $0xbc] sm:$0xf]
  %v2270 = vld [vmem:[%s3 + $0xc0] sm:$0xf]
  %v2271 = vld [vmem:[%s3 + $0xc4] sm:$0xf]
  %v2272 = vld [vmem:[%s3 + $0xc8] sm:$0xf]
  %v2273 = vld [vmem:[%s3 + $0xcc] sm:$0xf]
  %v2274 = vld [vmem:[%s3 + $0xd0] sm:$0xf]
  %v2275 = vld [vmem:[%s3 + $0xd4] sm:$0xf]
  %v2276 = vld [vmem:[%s3 + $0xd8] sm:$0xf]
  %v2277 = vld [vmem:[%s3 + $0xdc] sm:$0xf]
  %v2278 = vld [vmem:[%s3 + $0xe0] sm:$0xf]
  %v2279 = vld [vmem:[%s3 + $0xe4] sm:$0xf]
  %v2280 = vld [vmem:[%s3 + $0xe8] sm:$0xf]
  %v2281 = vld [vmem:[%s3 + $0xec] sm:$0xf]
  %v2282 = vld [vmem:[%s3 + $0xf0] sm:$0xf]
  %v2283 = vld [vmem:[%s3 + $0xf4] sm:$0xf]
  %v2284 = vld [vmem:[%s3 + $0xf8] sm:$0xf]
  %v2285 = vld [vmem:[%s3 + $0xfc] sm:$0xf]
  %v2286 = vld [vmem:[%s3 + $0x100] sm:$0xf]
  %v2287 = vld [vmem:[%s3 + $0x104] sm:$0xf]
  %v2288 = vld [vmem:[%s3 + $0x108] sm:$0xf]
  %v2289 = vld [vmem:[%s3 + $0x10c] sm:$0xf]
  %v2290 = vld [vmem:[%s3 + $0x110] sm:$0xf]
  %v2291 = vld [vmem:[%s3 + $0x114] sm:$0xf]
  %v2292 = vld [vmem:[%s3 + $0x118] sm:$0xf]
  %v2293 = vld [vmem:[%s3 + $0x11c] sm:$0xf]
  %v2294 = vld [vmem:[%s3 + $0x120] sm:$0xf]
  %v2295 = vld [vmem:[%s3 + $0x124] sm:$0xf]
  %v2296 = vld [vmem:[%s3 + $0x128] sm:$0xf]
  %v2297 = vld [vmem:[%s3 + $0x12c] sm:$0xf]
  %v2298 = vld [vmem:[%s3 + $0x130] sm:$0xf]
  %v2299 = vld [vmem:[%s3 + $0x134] sm:$0xf]
  %v2300 = vld [vmem:[%s3 + $0x138] sm:$0xf]
  %v2301 = vld [vmem:[%s3 + $0x13c] sm:$0xf]
  %v2302 = vld [vmem:[%s3 + $0x140] sm:$0xf]
  %v2303 = vld [vmem:[%s3 + $0x144] sm:$0xf]
  %v2304 = vld [vmem:[%s3 + $0x148] sm:$0xf]
  %v2305 = vld [vmem:[%s3 + $0x14c] sm:$0xf]
  %v2306 = vld [vmem:[%s3 + $0x150] sm:$0xf]
  %v2307 = vld [vmem:[%s3 + $0x154] sm:$0xf]
  %v2308 = vld [vmem:[%s3 + $0x158] sm:$0xf]
  %v2309 = vld [vmem:[%s3 + $0x15c] sm:$0xf]
  %v2310 = vld [vmem:[%s3 + $0x160] sm:$0xf]
  %v2311 = vld [vmem:[%s3 + $0x164] sm:$0xf]
  %v2312 = vld [vmem:[%s3 + $0x168] sm:$0xf]
  %v2313 = vld [vmem:[%s3 + $0x16c] sm:$0xf]
  %v2314 = vld [vmem:[%s3 + $0x170] sm:$0xf]
  %v2315 = vld [vmem:[%s3 + $0x174] sm:$0xf]
  %v2316 = vld [vmem:[%s3 + $0x178] sm:$0xf]
  %v2317 = vld [vmem:[%s3 + $0x17c] sm:$0xf]
  %v2318 = vld [vmem:[%s4] sm:$0x1]
  %v2320 = vlaneseq
  %v2321 = vshrl.u32 %v2320, 7
  %v2322 = vsub.s32 0, %v2321
  %v2323 = vrot.slane %v2318, %v2322
  %v2421 = vunpack.c.l.b16 %v2222
  %v2422 = vunpack.c.l.b16 %v2223
  %v2423 = vunpack.c.l.b16 %v2224
  %v2424 = vunpack.c.l.b16 %v2225
  %v2425 = vunpack.c.l.b16 %v2226
  %v2426 = vunpack.c.l.b16 %v2227
  %v2427 = vunpack.c.l.b16 %v2228
  %v2428 = vunpack.c.l.b16 %v2229
  %v2429 = vunpack.c.l.b16 %v2230
  %v2430 = vunpack.c.l.b16 %v2231
  %v2431 = vunpack.c.l.b16 %v2232
  %v2432 = vunpack.c.l.b16 %v2233
  %v2433 = vunpack.c.l.b16 %v2234
  %v2434 = vunpack.c.l.b16 %v2235
  %v2435 = vunpack.c.l.b16 %v2236
  %v2436 = vunpack.c.l.b16 %v2237
  %v2437 = vunpack.c.l.b16 %v2238
  %v2438 = vunpack.c.l.b16 %v2239
  %v2439 = vunpack.c.l.b16 %v2240
  %v2440 = vunpack.c.l.b16 %v2241
  %v2441 = vunpack.c.l.b16 %v2242
  %v2442 = vunpack.c.l.b16 %v2243
  %v2443 = vunpack.c.l.b16 %v2244
  %v2444 = vunpack.c.l.b16 %v2245
  %v2445 = vunpack.c.l.b16 %v2246
  %v2446 = vunpack.c.l.b16 %v2247
  %v2447 = vunpack.c.l.b16 %v2248
  %v2448 = vunpack.c.l.b16 %v2249
  %v2449 = vunpack.c.l.b16 %v2250
  %v2450 = vunpack.c.l.b16 %v2251
  %v2451 = vunpack.c.l.b16 %v2252
  %v2452 = vunpack.c.l.b16 %v2253
  %v2453 = vunpack.c.l.b16 %v2254
  %v2454 = vunpack.c.l.b16 %v2255
  %v2455 = vunpack.c.l.b16 %v2256
  %v2456 = vunpack.c.l.b16 %v2257
  %v2457 = vunpack.c.l.b16 %v2258
  %v2458 = vunpack.c.l.b16 %v2259
  %v2459 = vunpack.c.l.b16 %v2260
  %v2460 = vunpack.c.l.b16 %v2261
  %v2461 = vunpack.c.l.b16 %v2262
  %v2462 = vunpack.c.l.b16 %v2263
  %v2463 = vunpack.c.l.b16 %v2264
  %v2464 = vunpack.c.l.b16 %v2265
  %v2465 = vunpack.c.l.b16 %v2266
  %v2466 = vunpack.c.l.b16 %v2267
  %v2467 = vunpack.c.l.b16 %v2268
  %v2468 = vunpack.c.l.b16 %v2269
  %v2469 = vunpack.c.l.b16 %v2270
  %v2470 = vunpack.c.l.b16 %v2271
  %v2471 = vunpack.c.l.b16 %v2272
  %v2472 = vunpack.c.l.b16 %v2273
  %v2473 = vunpack.c.l.b16 %v2274
  %v2474 = vunpack.c.l.b16 %v2275
  %v2475 = vunpack.c.l.b16 %v2276
  %v2476 = vunpack.c.l.b16 %v2277
  %v2477 = vunpack.c.l.b16 %v2278
  %v2478 = vunpack.c.l.b16 %v2279
  %v2479 = vunpack.c.l.b16 %v2280
  %v2480 = vunpack.c.l.b16 %v2281
  %v2481 = vunpack.c.l.b16 %v2282
  %v2482 = vunpack.c.l.b16 %v2283
  %v2483 = vunpack.c.l.b16 %v2284
  %v2484 = vunpack.c.l.b16 %v2285
  %v2485 = vunpack.c.l.b16 %v2286
  %v2486 = vunpack.c.l.b16 %v2287
  %v2487 = vunpack.c.l.b16 %v2288
  %v2488 = vunpack.c.l.b16 %v2289
  %v2489 = vunpack.c.l.b16 %v2290
  %v2490 = vunpack.c.l.b16 %v2291
  %v2491 = vunpack.c.l.b16 %v2292
  %v2492 = vunpack.c.l.b16 %v2293
  %v2493 = vunpack.c.l.b16 %v2294
  %v2494 = vunpack.c.l.b16 %v2295
  %v2495 = vunpack.c.l.b16 %v2296
  %v2496 = vunpack.c.l.b16 %v2297
  %v2497 = vunpack.c.l.b16 %v2298
  %v2498 = vunpack.c.l.b16 %v2299
  %v2499 = vunpack.c.l.b16 %v2300
  %v2500 = vunpack.c.l.b16 %v2301
  %v2501 = vunpack.c.l.b16 %v2302
  %v2502 = vunpack.c.l.b16 %v2303
  %v2503 = vunpack.c.l.b16 %v2304
  %v2504 = vunpack.c.l.b16 %v2305
  %v2505 = vunpack.c.l.b16 %v2306
  %v2506 = vunpack.c.l.b16 %v2307
  %v2507 = vunpack.c.l.b16 %v2308
  %v2508 = vunpack.c.l.b16 %v2309
  %v2509 = vunpack.c.l.b16 %v2310
  %v2510 = vunpack.c.l.b16 %v2311
  %v2511 = vunpack.c.l.b16 %v2312
  %v2512 = vunpack.c.l.b16 %v2313
  %v2513 = vunpack.c.l.b16 %v2314
  %v2514 = vunpack.c.l.b16 %v2315
  %v2515 = vunpack.c.l.b16 %v2316
  %v2516 = vunpack.c.l.b16 %v2317
  %v2517 = vpack.c.b16 %v2422, %v2421
  %v2518 = vpack.c.b16 %v2424, %v2423
  %v2519 = vpack.c.b16 %v2426, %v2425
  %v2520 = vpack.c.b16 %v2428, %v2427
  %v2521 = vpack.c.b16 %v2430, %v2429
  %v2522 = vpack.c.b16 %v2432, %v2431
  %v2523 = vpack.c.b16 %v2434, %v2433
  %v2524 = vpack.c.b16 %v2436, %v2435
  %v2525 = vpack.c.b16 %v2438, %v2437
  %v2526 = vpack.c.b16 %v2440, %v2439
  %v2527 = vpack.c.b16 %v2442, %v2441
  %v2528 = vpack.c.b16 %v2444, %v2443
  %v2529 = vpack.c.b16 %v2446, %v2445
  %v2530 = vpack.c.b16 %v2448, %v2447
  %v2531 = vpack.c.b16 %v2450, %v2449
  %v2532 = vpack.c.b16 %v2452, %v2451
  %v2533 = vpack.c.b16 %v2454, %v2453
  %v2534 = vpack.c.b16 %v2456, %v2455
  %v2535 = vpack.c.b16 %v2458, %v2457
  %v2536 = vpack.c.b16 %v2460, %v2459
  %v2537 = vpack.c.b16 %v2462, %v2461
  %v2538 = vpack.c.b16 %v2464, %v2463
  %v2539 = vpack.c.b16 %v2466, %v2465
  %v2540 = vpack.c.b16 %v2468, %v2467
  %v2541 = vpack.c.b16 %v2470, %v2469
  %v2542 = vpack.c.b16 %v2472, %v2471
  %v2543 = vpack.c.b16 %v2474, %v2473
  %v2544 = vpack.c.b16 %v2476, %v2475
  %v2545 = vpack.c.b16 %v2478, %v2477
  %v2546 = vpack.c.b16 %v2480, %v2479
  %v2547 = vpack.c.b16 %v2482, %v2481
  %v2548 = vpack.c.b16 %v2484, %v2483
  %v2549 = vpack.c.b16 %v2486, %v2485
  %v2550 = vpack.c.b16 %v2488, %v2487
  %v2551 = vpack.c.b16 %v2490, %v2489
  %v2552 = vpack.c.b16 %v2492, %v2491
  %v2553 = vpack.c.b16 %v2494, %v2493
  %v2554 = vpack.c.b16 %v2496, %v2495
  %v2555 = vpack.c.b16 %v2498, %v2497
  %v2556 = vpack.c.b16 %v2500, %v2499
  %v2557 = vpack.c.b16 %v2502, %v2501
  %v2558 = vpack.c.b16 %v2504, %v2503
  %v2559 = vpack.c.b16 %v2506, %v2505
  %v2560 = vpack.c.b16 %v2508, %v2507
  %v2561 = vpack.c.b16 %v2510, %v2509
  %v2562 = vpack.c.b16 %v2512, %v2511
  %v2563 = vpack.c.b16 %v2514, %v2513
  %v2564 = vpack.c.b16 %v2516, %v2515
  %2613 = vmatprep.subr.bf16.mxu0 0
  %2614 = vmatpush1.bf16.msra.mxu0 %v2517
  %2615 = vmatprep.subr.bf16.mxu0 0
  %2616 = vmatpush1.bf16.msra.mxu0 %v2518
  %2617 = vmatprep.subr.bf16.mxu0 0
  %2618 = vmatpush1.bf16.msra.mxu0 %v2519
  %2619 = vmatprep.subr.bf16.mxu0 0
  %2620 = vmatpush1.bf16.msra.mxu0 %v2520
  %2621 = vmatprep.subr.bf16.mxu0 0
  %2622 = vmatpush1.bf16.msra.mxu0 %v2521
  %2623 = vmatprep.subr.bf16.mxu0 0
  %2624 = vmatpush1.bf16.msra.mxu0 %v2522
  %2625 = vmatprep.subr.bf16.mxu0 0
  %2626 = vmatpush1.bf16.msra.mxu0 %v2523
  %2627 = vmatprep.subr.bf16.mxu0 0
  %2628 = vmatpush1.bf16.msra.mxu0 %v2524
  %2629 = vmatprep.subr.bf16.mxu0 0
  %2630 = vmatpush1.bf16.msra.mxu0 %v2525
  %2631 = vmatprep.subr.bf16.mxu0 0
  %2632 = vmatpush1.bf16.msra.mxu0 %v2526
  %2633 = vmatprep.subr.bf16.mxu0 0
  %2634 = vmatpush1.bf16.msra.mxu0 %v2527
  %2635 = vmatprep.subr.bf16.mxu0 0
  %2636 = vmatpush1.bf16.msra.mxu0 %v2528
  %2637 = vmatprep.subr.bf16.mxu0 0
  %2638 = vmatpush1.bf16.msra.mxu0 %v2529
  %2639 = vmatprep.subr.bf16.mxu0 0
  %2640 = vmatpush1.bf16.msra.mxu0 %v2530
  %2641 = vmatprep.subr.bf16.mxu0 0
  %2642 = vmatpush1.bf16.msra.mxu0 %v2531
  %2643 = vmatprep.subr.bf16.mxu0 0
  %2644 = vmatpush1.bf16.msra.mxu0 %v2532
  %2645 = vmatprep.mubr.bf16.mxu0 %v2217
  %2646 = vmatmul.mubr.bf16.gmra.mrb[0].mxu0 %v2216
  %v2647 = vpop.f32.mrb[0].mxu0
  %v2648 = vadd.f32 %v2323, %v2647
  %v2649 = vpop.f32.mrb[0].mxu0
  %v2650 = vpop.f32.mrb[0].mxu0
  %v2651 = vadd.f32 %v2323, %v2650
  %v2652 = vpop.f32.mrb[0].mxu0
  %2653 = vdwg.mxu0
  %2654 = vmatprep.subr.bf16.mxu0 0
  %2655 = vmatpush1.bf16.msra.mxu0 %v2533
  %2656 = vmatprep.subr.bf16.mxu0 0
  %2657 = vmatpush1.bf16.msra.mxu0 %v2534
  %2658 = vmatprep.subr.bf16.mxu0 0
  %2659 = vmatpush1.bf16.msra.mxu0 %v2535
  %2660 = vmatprep.subr.bf16.mxu0 0
  %2661 = vmatpush1.bf16.msra.mxu0 %v2536
  %2662 = vmatprep.subr.bf16.mxu0 0
  %2663 = vmatpush1.bf16.msra.mxu0 %v2537
  %2664 = vmatprep.subr.bf16.mxu0 0
  %2665 = vmatpush1.bf16.msra.mxu0 %v2538
  %2666 = vmatprep.subr.bf16.mxu0 0
  %2667 = vmatpush1.bf16.msra.mxu0 %v2539
  %2668 = vmatprep.subr.bf16.mxu0 0
  %2669 = vmatpush1.bf16.msra.mxu0 %v2540
  %2670 = vmatprep.subr.bf16.mxu0 0
  %2671 = vmatpush1.bf16.msra.mxu0 %v2541
  %2672 = vmatprep.subr.bf16.mxu0 0
  %2673 = vmatpush1.bf16.msra.mxu0 %v2542
  %2674 = vmatprep.subr.bf16.mxu0 0
  %2675 = vmatpush1.bf16.msra.mxu0 %v2543
  %2676 = vmatprep.subr.bf16.mxu0 0
  %2677 = vmatpush1.bf16.msra.mxu0 %v2544
  %2678 = vmatprep.subr.bf16.mxu0 0
  %2679 = vmatpush1.bf16.msra.mxu0 %v2545
  %2680 = vmatprep.subr.bf16.mxu0 0
  %2681 = vmatpush1.bf16.msra.mxu0 %v2546
  %2682 = vmatprep.subr.bf16.mxu0 0
  %2683 = vmatpush1.bf16.msra.mxu0 %v2547
  %2684 = vmatprep.subr.bf16.mxu0 0
  %2685 = vmatpush1.bf16.msra.mxu0 %v2548
  %2686 = vmatprep.mubr.bf16.mxu0 %v2219
  %2687 = vmatmul.mubr.bf16.gmra.mrb[0].mxu0 %v2218
  %v2688 = vpop.f32.mrb[0].mxu0
  %v2689 = vadd.f32 %v2648, %v2688
  %v2690 = vpop.f32.mrb[0].mxu0
  %v2691 = vpop.f32.mrb[0].mxu0
  %v2692 = vadd.f32 %v2651, %v2691
  %v2693 = vpop.f32.mrb[0].mxu0
  %2694 = vdwg.mxu0
  %2695 = vmatprep.subr.bf16.mxu0 0
  %2696 = vmatpush1.bf16.msra.mxu0 %v2549
  %2697 = vmatprep.subr.bf16.mxu0 0
  %2698 = vmatpush1.bf16.msra.mxu0 %v2550
  %2699 = vmatprep.subr.bf16.mxu0 0
  %2700 = vmatpush1.bf16.msra.mxu0 %v2551
  %2701 = vmatprep.subr.bf16.mxu0 0
  %2702 = vmatpush1.bf16.msra.mxu0 %v2552
  %2703 = vmatprep.subr.bf16.mxu0 0
  %2704 = vmatpush1.bf16.msra.mxu0 %v2553
  %2705 = vmatprep.subr.bf16.mxu0 0
  %2706 = vmatpush1.bf16.msra.mxu0 %v2554
  %2707 = vmatprep.subr.bf16.mxu0 0
  %2708 = vmatpush1.bf16.msra.mxu0 %v2555
  %2709 = vmatprep.subr.bf16.mxu0 0
  %2710 = vmatpush1.bf16.msra.mxu0 %v2556
  %2711 = vmatprep.subr.bf16.mxu0 0
  %2712 = vmatpush1.bf16.msra.mxu0 %v2557
  %2713 = vmatprep.subr.bf16.mxu0 0
  %2714 = vmatpush1.bf16.msra.mxu0 %v2558
  %2715 = vmatprep.subr.bf16.mxu0 0
  %2716 = vmatpush1.bf16.msra.mxu0 %v2559
  %2717 = vmatprep.subr.bf16.mxu0 0
  %2718 = vmatpush1.bf16.msra.mxu0 %v2560
  %2719 = vmatprep.subr.bf16.mxu0 0
  %2720 = vmatpush1.bf16.msra.mxu0 %v2561
  %2721 = vmatprep.subr.bf16.mxu0 0
  %2722 = vmatpush1.bf16.msra.mxu0 %v2562
  %2723 = vmatprep.subr.bf16.mxu0 0
  %2724 = vmatpush1.bf16.msra.mxu0 %v2563
  %2725 = vmatprep.subr.bf16.mxu0 0
  %2726 = vmatpush1.bf16.msra.mxu0 %v2564
  %2727 = vmatprep.mubr.bf16.mxu0 %v2221
  %2728 = vmatmul.mubr.bf16.gmra.mrb[0].mxu0 %v2220
  %v2729 = vpop.f32.mrb[0].mxu0
  %v2730 = vadd.f32 %v2689, %v2729
  %v2731 = vpop.f32.mrb[0].mxu0
  %v2732 = vpop.f32.mrb[0].mxu0
  %v2733 = vadd.f32 %v2692, %v2732
  %v2734 = vpop.f32.mrb[0].mxu0
  %2735 = vdwg.mxu0
  %v2736 = vpack.c.bf16 %v2733, %v2730
  %v2737 = vmax.bf16 %v2736, 0
  %v2738 = vld [vmem:[%s5] sm:$0xf]
  %v2739 = vld [vmem:[%s5 + $0x4] sm:$0xf]
  %v2740 = vld [vmem:[%s5 + $0x8] sm:$0xf]
  %v2741 = vld [vmem:[%s5 + $0xc] sm:$0xf]
  %v2742 = vld [vmem:[%s5 + $0x10] sm:$0xf]
  %v2743 = vld [vmem:[%s5 + $0x14] sm:$0xf]
  %v2744 = vld [vmem:[%s5 + $0x18] sm:$0xf]
  %v2745 = vld [vmem:[%s5 + $0x1c] sm:$0xf]
  %v2746 = vld [vmem:[%s5 + $0x20] sm:$0xf]
  %v2747 = vld [vmem:[%s5 + $0x24] sm:$0xf]
  %v2748 = vld [vmem:[%s5 + $0x28] sm:$0xf]
  %v2749 = vld [vmem:[%s5 + $0x2c] sm:$0xf]
  %v2750 = vld [vmem:[%s5 + $0x30] sm:$0xf]
  %v2751 = vld [vmem:[%s5 + $0x34] sm:$0xf]
  %v2752 = vld [vmem:[%s5 + $0x38] sm:$0xf]
  %v2753 = vld [vmem:[%s5 + $0x3c] sm:$0xf]
  %v2754 = vld [vmem:[%s6] sm:$0x1]
  %v2756 = vlaneseq
  %v2757 = vshrl.u32 %v2756, 7
  %v2758 = vsub.s32 0, %v2757
  %v2759 = vrot.slane %v2754, %v2758
  %v2777 = vunpack.c.l.b16 %v2738
  %v2778 = vunpack.c.l.b16 %v2739
  %v2779 = vunpack.c.l.b16 %v2740
  %v2780 = vunpack.c.l.b16 %v2741
  %v2781 = vunpack.c.l.b16 %v2742
  %v2782 = vunpack.c.l.b16 %v2743
  %v2783 = vunpack.c.l.b16 %v2744
  %v2784 = vunpack.c.l.b16 %v2745
  %v2785 = vunpack.c.l.b16 %v2746
  %v2786 = vunpack.c.l.b16 %v2747
  %v2787 = vunpack.c.l.b16 %v2748
  %v2788 = vunpack.c.l.b16 %v2749
  %v2789 = vunpack.c.l.b16 %v2750
  %v2790 = vunpack.c.l.b16 %v2751
  %v2791 = vunpack.c.l.b16 %v2752
  %v2792 = vunpack.c.l.b16 %v2753
  %v2793 = vpack.c.b16 %v2778, %v2777
  %v2794 = vpack.c.b16 %v2780, %v2779
  %v2795 = vpack.c.b16 %v2782, %v2781
  %v2796 = vpack.c.b16 %v2784, %v2783
  %v2797 = vpack.c.b16 %v2786, %v2785
  %v2798 = vpack.c.b16 %v2788, %v2787
  %v2799 = vpack.c.b16 %v2790, %v2789
  %v2800 = vpack.c.b16 %v2792, %v2791
  %2809 = vmatprep.subr.bf16.mxu0 0
  %2810 = vmatpush1.bf16.msra.mxu0 %v2793
  %2811 = vmatprep.subr.bf16.mxu0 0
  %2812 = vmatpush1.bf16.msra.mxu0 %v2794
  %2813 = vmatprep.subr.bf16.mxu0 0
  %2814 = vmatpush1.bf16.msra.mxu0 %v2795
  %2815 = vmatprep.subr.bf16.mxu0 0
  %2816 = vmatpush1.bf16.msra.mxu0 %v2796
  %2817 = vmatprep.subr.bf16.mxu0 0
  %2818 = vmatpush1.bf16.msra.mxu0 %v2797
  %2819 = vmatprep.subr.bf16.mxu0 0
  %2820 = vmatpush1.bf16.msra.mxu0 %v2798
  %2821 = vmatprep.subr.bf16.mxu0 0
  %2822 = vmatpush1.bf16.msra.mxu0 %v2799
  %2823 = vmatprep.subr.bf16.mxu0 0
  %2824 = vmatpush1.bf16.msra.mxu0 %v2800
  %2825 = vmatprep.subr.bf16.mxu0 0
  %2826 = vmatpush1.bf16.msra.mxu0 0
  %2827 = vmatprep.subr.bf16.mxu0 0
  %2828 = vmatpush1.bf16.msra.mxu0 0
  %2829 = vmatprep.subr.bf16.mxu0 0
  %2830 = vmatpush1.bf16.msra.mxu0 0
  %2831 = vmatprep.subr.bf16.mxu0 0
  %2832 = vmatpush1.bf16.msra.mxu0 0
  %2833 = vmatprep.subr.bf16.mxu0 0
  %2834 = vmatpush1.bf16.msra.mxu0 0
  %2835 = vmatprep.subr.bf16.mxu0 0
  %2836 = vmatpush1.bf16.msra.mxu0 0
  %2837 = vmatprep.subr.bf16.mxu0 0
  %2838 = vmatpush1.bf16.msra.mxu0 0
  %2839 = vmatprep.subr.bf16.mxu0 0
  %2840 = vmatpush1.bf16.msra.mxu0 0
  %2841 = vmatprep.mubr.bf16.mxu0 0
  %2842 = vmatmul.mubr.bf16.gmra.mrb[0].mxu0 %v2737
  %v2843 = vpop.f32.mrb[0].mxu0
  %v2844 = vadd.f32 %v2759, %v2843
  %v2845 = vpop.f32.mrb[0].mxu0
  %v2846 = vpop.f32.mrb[0].mxu0
  %v2847 = vadd.f32 %v2759, %v2846
  %v2848 = vpop.f32.mrb[0].mxu0
  %2849 = vdwg.mxu0
  %2850 = vst [vmem:[%s7] sm:$0xff] %v2844
  %2851 = vst [vmem:[%s7 + $0x8] sm:$0xff] %v2847
  // Predicated region
  $region30: #{shared_task_classifier_forward.1} parent=0 // pred_check
    _
  $region31: #{shared_task_classifier_forward.1} parent=0 // pred_check_branch
    %2853 = sbr.rel (0) target = $region33
  $region32: #{shared_task_classifier_forward.1} parent=0 // pred_region
    _
  $region33: #{shared_task_classifier_forward.1} parent=0 // pred_fallthru
    _
  // Predicated region
  $region34: #{shared_task_classifier_forward.1} parent=0 // pred_check
    _
  $region35: #{shared_task_classifier_forward.1} parent=0 // pred_check_branch
    %2855 = sbr.rel (0) target = $region37
  $region36: #{shared_task_classifier_forward.1} parent=0 // pred_region
    _
  $region37: #{shared_task_classifier_forward.1} parent=0 // pred_fallthru
    _

</llo_original>
